<compile_context>
chip_gen: v7x
topology: tpu7x:2x2x1
jax: 0.10.0
libtpu: 0.0.40
codegen_flags: <defaults>
</compile_context>

<pallas_src>
import functools

import jax
import jax.numpy as jnp
from jax import lax
from jax.experimental import pallas as pl
from jax.experimental.pallas import tpu as pltpu

# 48 MiB: above v5e's 16 MiB / v6e's 32 MiB scoped default, but leaves headroom
# below v7x's 64 MiB physical per-TC VMEM (never request all of it).
_VMEM_LIMIT = 48 * 1024 * 1024


def _round_up(x, m):
    return ((x + m - 1) // m) * m


def _pick_tm(m):
    """Row-tile size: single tile for small inputs; otherwise 256 when it adds
    no extra row padding over 128 (bigger MXU pass), else 128 (min padding)."""
    m8 = _round_up(m, 8)
    if m8 <= 256:
        return m8
    return 256 if _round_up(m, 256) == _round_up(m, 128) else 128


# --------------------------------------------------------------------------
# Fused linear (matmul + bias) kernel: used for the qkv and proj projections.
# --------------------------------------------------------------------------
def _linear_kernel(x_ref, w_ref, b_ref, o_ref):
    # MXU: bf16 inputs, f32 accumulation; bias added in f32.
    x = x_ref[...].astype(jnp.bfloat16)          # no-op if already bf16
    acc = jnp.dot(x, w_ref[...], preferred_element_type=jnp.float32)
    o_ref[...] = (acc + b_ref[...]).astype(o_ref.dtype)


def linear_pallas(x2d, w, b, *, out_dtype=jnp.float32):
    """y = x2d @ w + b.   x2d: (M, Cin) f32/bf16, w: (Cin, Cout), b: (Cout,)."""
    M, Cin = x2d.shape
    Cout = w.shape[1]
    tm = _pick_tm(M)
    m_p = _round_up(M, tm)

    x_p = x2d if m_p == M else jnp.pad(x2d, ((0, m_p - M), (0, 0)))
    w_b = w.astype(jnp.bfloat16)                   # one-time cast, resident block
    b_b = b.reshape(1, Cout).astype(jnp.float32)

    cost = pl.CostEstimate(
        flops=2 * m_p * Cin * Cout,
        transcendentals=0,
        bytes_accessed=int(m_p * Cin * x_p.dtype.itemsize + Cin * Cout * 2
                           + Cout * 4 + m_p * Cout * jnp.dtype(out_dtype).itemsize),
    )

    y_p = pl.pallas_call(
        _linear_kernel,
        out_shape=jax.ShapeDtypeStruct((m_p, Cout), out_dtype),
        grid_spec=pltpu.PrefetchScalarGridSpec(
            num_scalar_prefetch=0,
            grid=(m_p // tm,),
            in_specs=[
                pl.BlockSpec((tm, Cin), lambda i: (i, 0)),     # activation row tile
                # TODO(synk): single-buffer these constant blocks
                # (pipeline_mode=pl.Buffered(1)) to halve weight VMEM on v7x.
                pl.BlockSpec((Cin, Cout), lambda i: (0, 0)),   # weight (resident)
                pl.BlockSpec((1, Cout), lambda i: (0, 0)),     # bias (resident)
            ],
            out_specs=pl.BlockSpec((tm, Cout), lambda i: (i, 0)),
        ),
        compiler_params=pltpu.CompilerParams(
            dimension_semantics=("parallel",),
            vmem_limit_bytes=_VMEM_LIMIT,
        ),
        cost_estimate=cost,
    )(x_p, w_b, b_b)
    return y_p if m_p == M else y_p[:M]


# --------------------------------------------------------------------------
# Fused multi-head attention kernel: one grid step = one batch element,
# all heads and all query rows processed in-kernel.  Head split / merge is
# done with static column slices of the qkv feature axis, so the wrapper
# needs no transposes and no head_dim padding.
# --------------------------------------------------------------------------
def _mha_kernel(qkv_ref, o_ref, *, num_heads, head_dim, scale):
    # qkv_ref: (N, 3*C) bf16 for one batch element, feature layout
    #   [q_h0..q_h{H-1} | k_h0..k_h{H-1} | v_h0..v_h{H-1}], per-head width Dh.
    # o_ref:   (N, C)   heads already merged in memory.
    C = num_heads * head_dim
    for h in range(num_heads):                     # static unroll over heads
        q = qkv_ref[:, h * head_dim:(h + 1) * head_dim]
        k = qkv_ref[:, C + h * head_dim:C + (h + 1) * head_dim]
        v = qkv_ref[:, 2 * C + h * head_dim:2 * C + (h + 1) * head_dim]
        # Scale q (N x Dh) instead of the (N x N) score matrix.
        q = (q.astype(jnp.float32) * scale).astype(jnp.bfloat16)
        s = lax.dot_general(q, k, (((1,), (1,)), ((), ())),
                            preferred_element_type=jnp.float32)       # (N, N)
        m = jnp.max(s, axis=-1, keepdims=True)
        p = jnp.exp(s - m)                                             # EUP
        l = jnp.sum(p, axis=-1, keepdims=True)
        # Deferred softmax normalization: P@V first, divide the small output.
        o = lax.dot_general(p.astype(jnp.bfloat16), v, (((1,), (0,)), ((), ())),
                            preferred_element_type=jnp.float32)        # (N, Dh)
        o = o * pl.reciprocal(l, approx=True)                          # EUP recip
        o_ref[:, h * head_dim:(h + 1) * head_dim] = o.astype(o_ref.dtype)


def attention_pallas(qkv, *, num_heads, head_dim, scale, out_dtype=jnp.bfloat16):
    """qkv: (B, N, 3*C) bf16  ->  attention output (B, N, C), heads merged."""
    B, N, threeC = qkv.shape
    C = num_heads * head_dim
    kernel = functools.partial(_mha_kernel, num_heads=num_heads,
                               head_dim=head_dim, scale=scale)
    cost = pl.CostEstimate(
        flops=4 * B * num_heads * N * N * head_dim,
        transcendentals=B * num_heads * N * N,
        bytes_accessed=int(B * N * threeC * 2 + B * N * C * 2),
    )
    # TODO(synk): for long sequences (N >> 1k) add a q-row grid axis so the
    # (N, N) score tile stays bounded; ViT-scale N fits comfortably.
    return pl.pallas_call(
        kernel,
        out_shape=jax.ShapeDtypeStruct((B, N, C), out_dtype),
        grid_spec=pltpu.PrefetchScalarGridSpec(
            num_scalar_prefetch=0,
            grid=(B,),                      # all heads + all rows per step
            in_specs=[pl.BlockSpec((None, N, threeC), lambda b: (b, 0, 0))],
            out_specs=pl.BlockSpec((None, N, C), lambda b: (b, 0, 0)),
        ),
        compiler_params=pltpu.CompilerParams(
            dimension_semantics=("parallel",),
            vmem_limit_bytes=_VMEM_LIMIT,
        ),
        cost_estimate=cost,
    )(qkv)


# --------------------------------------------------------------------------
# Full forward pass (only free reshapes in the wrapper: no transposes, no
# feature padding, no extra cast passes).
# --------------------------------------------------------------------------
@functools.partial(jax.jit, static_argnames=("num_heads",))
def attention_forward(x, w_qkv, b_qkv, w_proj, b_proj, *, num_heads):
    B, N, C = x.shape
    head_dim = C // num_heads
    scale = head_dim ** (-0.5)

    # qkv projection -> bf16 (largest activation; consumed in bf16 by attention)
    qkv = linear_pallas(x.reshape(B * N, C), w_qkv, b_qkv,
                        out_dtype=jnp.bfloat16)                     # (B*N, 3C)
    qkv = qkv.reshape(B, N, 3 * C)

    # fused multi-head attention; output is already merged-head (B, N, C) bf16
    o = attention_pallas(qkv, num_heads=num_heads, head_dim=head_dim, scale=scale)

    # output projection (f32 output to match the reference module dtype)
    # TODO(synk): attn_drop / proj_drop with p=0.0 are identities; non-zero p
    # would need pltpu.prng_seed / prng_random_bits masks.
    y = linear_pallas(o.reshape(B * N, C), w_proj, b_proj, out_dtype=jnp.float32)
    return y.reshape(B, N, C)


# --------------------------------------------------------------------------
# Pure-JAX reference of the PyTorch forward (drop=0.0, qkv_bias handled).
# --------------------------------------------------------------------------
def attention_reference(x, w_qkv, b_qkv, w_proj, b_proj, *, num_heads):
    B, N, C = x.shape
    head_dim = C // num_heads
    scale = head_dim ** (-0.5)
    qkv = (x @ w_qkv + b_qkv).reshape(B, N, 3, num_heads, head_dim)
    qkv = qkv.transpose(2, 0, 3, 1, 4)
    q, k, v = qkv[0], qkv[1], qkv[2]
    attn = jnp.einsum("bhqd,bhkd->bhqk", q, k) * scale
    attn = jax.nn.softmax(attn, axis=-1)
    o = jnp.einsum("bhqk,bhkd->bhqd", attn, v)
    o = o.transpose(0, 2, 1, 3).reshape(B, N, C)
    return o @ w_proj + b_proj


if __name__ == "__main__":
    key = jax.random.PRNGKey(0)
    kx, k1, k2, k3 = jax.random.split(key, 4)

    B, N, C, num_heads = 2, 8, 32, 8          # head_dim = 4
    x = jax.random.normal(kx, (B, N, C), dtype=jnp.float32)

    lim = 1.0 / (C ** 0.5)
    w_qkv = jax.random.uniform(k1, (C, 3 * C), jnp.float32, -lim, lim)
    b_qkv = jnp.zeros((3 * C,), jnp.float32)  # module default: qkv_bias=False
    w_proj = jax.random.uniform(k2, (C, C), jnp.float32, -lim, lim)
    b_proj = jax.random.uniform(k3, (C,), jnp.float32, -lim, lim)

    y = attention_forward(x, w_qkv, b_qkv, w_proj, b_proj, num_heads=num_heads)
    y = jax.block_until_ready(y)

    y_ref = attention_reference(x, w_qkv, b_qkv, w_proj, b_proj, num_heads=num_heads)
    assert y.shape == (B, N, C)
    max_err = float(jnp.max(jnp.abs(y - y_ref)))
    # bf16 MXU inputs + approx reciprocal -> compare at bf16-level tolerance.
    assert jnp.allclose(y, y_ref, atol=3e-2, rtol=3e-2), f"mismatch, max abs err {max_err}"

    print("KERNEL_OK")
</pallas_src>

<mosaic_0001>
module attributes {stable_mosaic.version = 11 : i64} {
  func.func @_linear_kernel(%arg0: i32, %arg1: memref<16x32xf32, #tpu.memory_space<vmem>>, %arg2: memref<32x96xbf16, #tpu.memory_space<vmem>>, %arg3: memref<1x96xf32, #tpu.memory_space<vmem>>, %arg4: memref<16x96xbf16, #tpu.memory_space<vmem>>) attributes {dimension_semantics = [#tpu.dimension_semantics<parallel>], iteration_bounds = array<i64: 1>, scalar_prefetch = 0 : i64, scratch_operands = 0 : i64, tpu.core_type = #tpu.core_type<tc>, window_params = [{transform_indices = @transform_0, window_bounds = array<i64: 16, 32>}, {pipeline_mode = #tpu.pipeline_mode<synchronous>, transform_indices = @transform_1, window_bounds = array<i64: 32, 96>}, {pipeline_mode = #tpu.pipeline_mode<synchronous>, transform_indices = @transform_2, window_bounds = array<i64: 1, 96>}, {transform_indices = @transform_3, window_bounds = array<i64: 16, 96>}]} {
    %c0 = arith.constant 0 : index
    %c0_0 = arith.constant 0 : index
    %0 = vector.load %arg1[%c0, %c0_0] : memref<16x32xf32, #tpu.memory_space<vmem>>, vector<16x32xf32>
    %1 = arith.truncf %0 : vector<16x32xf32> to vector<16x32xbf16>
    %c0_1 = arith.constant 0 : index
    %c0_2 = arith.constant 0 : index
    %2 = vector.load %arg2[%c0_1, %c0_2] : memref<32x96xbf16, #tpu.memory_space<vmem>>, vector<32x96xbf16>
    %cst = arith.constant dense<0.000000e+00> : vector<16x96xf32>
    %3 = tpu.matmul %1, %2, %cst {dimension_numbers = #tpu.dot_dimension_numbers<[1], [0], [0], [1], [0, 0, 1, 1], [], []>} : vector<16x32xbf16>, vector<32x96xbf16>, vector<16x96xf32> -> vector<16x96xf32>
    %c0_3 = arith.constant 0 : index
    %c0_4 = arith.constant 0 : index
    %4 = vector.load %arg3[%c0_3, %c0_4] : memref<1x96xf32, #tpu.memory_space<vmem>>, vector<1x96xf32>
    %5 = vector.broadcast %4 : vector<1x96xf32> to vector<16x96xf32>
    %6 = arith.addf %3, %5 : vector<16x96xf32>
    %7 = arith.truncf %6 : vector<16x96xf32> to vector<16x96xbf16>
    %c0_5 = arith.constant 0 : index
    %c0_6 = arith.constant 0 : index
    %8 = vector.load %arg4[%c0_5, %c0_6] : memref<16x96xbf16, #tpu.memory_space<vmem>>, vector<16x96xbf16>
    tpu.vector_store %arg4[%c0_5, %c0_6], %7 {strides = array<i32>} : memref<16x96xbf16, #tpu.memory_space<vmem>>, vector<16x96xbf16>,
    return
  }
  func.func @transform_0(%arg0: i32) -> (i32, i32) {
    %c0_i32 = arith.constant 0 : i32
    %c0_i32_0 = arith.constant 0 : i32
    return %arg0, %c0_i32 : i32, i32
  }
  func.func @transform_1(%arg0: i32) -> (i32, i32) {
    %c0_i32 = arith.constant 0 : i32
    %c0_i32_0 = arith.constant 0 : i32
    %c0_i32_1 = arith.constant 0 : i32
    return %c0_i32, %c0_i32_0 : i32, i32
  }
  func.func @transform_2(%arg0: i32) -> (i32, i32) {
    %c0_i32 = arith.constant 0 : i32
    %c0_i32_0 = arith.constant 0 : i32
    %c0_i32_1 = arith.constant 0 : i32
    return %c0_i32, %c0_i32_0 : i32, i32
  }
  func.func @transform_3(%arg0: i32) -> (i32, i32) {
    %c0_i32 = arith.constant 0 : i32
    %c0_i32_0 = arith.constant 0 : i32
    return %arg0, %c0_i32 : i32, i32
  }
}

module attributes {stable_mosaic.version = 11 : i64} {
  func.func @_mha_kernel(%arg0: i32, %arg1: memref<1x8x96xbf16, #tpu.memory_space<vmem>>, %arg2: memref<1x8x32xbf16, #tpu.memory_space<vmem>>) attributes {dimension_semantics = [#tpu.dimension_semantics<parallel>], iteration_bounds = array<i64: 2>, scalar_prefetch = 0 : i64, scratch_operands = 0 : i64, tpu.core_type = #tpu.core_type<tc>, window_params = [{transform_indices = @transform_0, window_bounds = array<i64: 1, 8, 96>}, {transform_indices = @transform_1, window_bounds = array<i64: 1, 8, 32>}]} {
    %c0 = arith.constant 0 : index
    %c0_0 = arith.constant 0 : index
    %c0_1 = arith.constant 0 : index
    %0 = vector.load %arg1[%c0, %c0_0, %c0_1] : memref<1x8x96xbf16, #tpu.memory_space<vmem>>, vector<1x8x4xbf16>
    %1 = vector.shape_cast %0 : vector<1x8x4xbf16> to vector<8x4xbf16>
    %c0_2 = arith.constant 0 : index
    %c0_3 = arith.constant 0 : index
    %c32 = arith.constant 32 : index
    %2 = vector.load %arg1[%c0_2, %c0_3, %c32] : memref<1x8x96xbf16, #tpu.memory_space<vmem>>, vector<1x8x4xbf16>
    %3 = vector.shape_cast %2 : vector<1x8x4xbf16> to vector<8x4xbf16>
    %c0_4 = arith.constant 0 : index
    %c0_5 = arith.constant 0 : index
    %c64 = arith.constant 64 : index
    %4 = vector.load %arg1[%c0_4, %c0_5, %c64] : memref<1x8x96xbf16, #tpu.memory_space<vmem>>, vector<1x8x4xbf16>
    %5 = vector.shape_cast %4 : vector<1x8x4xbf16> to vector<8x4xbf16>
    %6 = arith.extf %1 : vector<8x4xbf16> to vector<8x4xf32>
    %cst = arith.constant 5.000000e-01 : f32
    %7 = vector.broadcast %cst : f32 to vector<8x4xf32>
    %8 = arith.mulf %6, %7 : vector<8x4xf32>
    %9 = arith.truncf %8 : vector<8x4xf32> to vector<8x4xbf16>
    %cst_6 = arith.constant dense<0.000000e+00> : vector<8x8xf32>
    %10 = tpu.matmul %9, %3, %cst_6 {dimension_numbers = #tpu.dot_dimension_numbers<[1], [1], [0], [0], [0, 0, 1, 0], [], []>} : vector<8x4xbf16>, vector<8x4xbf16>, vector<8x8xf32> -> vector<8x8xf32>
    %cst_7 = arith.constant dense<0xFF800000> : vector<8xf32>
    %11 = vector.multi_reduction <maximumf>, %10, %cst_7 [1] : vector<8x8xf32> to vector<8xf32>
    %12 = vector.shape_cast %11 : vector<8xf32> to vector<8x1xf32>
    %13 = vector.broadcast %12 : vector<8x1xf32> to vector<8x8xf32>
    %14 = arith.subf %10, %13 : vector<8x8xf32>
    %15 = math.exp %14 : vector<8x8xf32>
    %cst_8 = arith.constant dense<0.000000e+00> : vector<8xf32>
    %16 = vector.multi_reduction <add>, %15, %cst_8 [1] : vector<8x8xf32> to vector<8xf32>
    %17 = vector.shape_cast %16 : vector<8xf32> to vector<8x1xf32>
    %18 = arith.truncf %15 : vector<8x8xf32> to vector<8x8xbf16>
    %cst_9 = arith.constant dense<0.000000e+00> : vector<8x4xf32>
    %19 = tpu.matmul %18, %5, %cst_9 {dimension_numbers = #tpu.dot_dimension_numbers<[1], [0], [0], [1], [0, 0, 1, 1], [], []>} : vector<8x8xbf16>, vector<8x4xbf16>, vector<8x4xf32> -> vector<8x4xf32>
    %20 = tpu.reciprocal %17 {approx = true} : vector<8x1xf32> -> vector<8x1xf32>
    %21 = vector.broadcast %20 : vector<8x1xf32> to vector<8x4xf32>
    %22 = arith.mulf %19, %21 : vector<8x4xf32>
    %23 = arith.truncf %22 : vector<8x4xf32> to vector<8x4xbf16>
    %c0_10 = arith.constant 0 : index
    %c0_11 = arith.constant 0 : index
    %c0_12 = arith.constant 0 : index
    %24 = vector.load %arg2[%c0_10, %c0_11, %c0_12] : memref<1x8x32xbf16, #tpu.memory_space<vmem>>, vector<1x8x4xbf16>
    %25 = vector.shape_cast %24 : vector<1x8x4xbf16> to vector<8x4xbf16>
    %26 = vector.shape_cast %23 : vector<8x4xbf16> to vector<1x8x4xbf16>
    tpu.vector_store %arg2[%c0_10, %c0_11, %c0_12], %26 {strides = array<i32>} : memref<1x8x32xbf16, #tpu.memory_space<vmem>>, vector<1x8x4xbf16>,
    %c0_13 = arith.constant 0 : index
    %c0_14 = arith.constant 0 : index
    %c4 = arith.constant 4 : index
    %27 = vector.load %arg1[%c0_13, %c0_14, %c4] : memref<1x8x96xbf16, #tpu.memory_space<vmem>>, vector<1x8x4xbf16>
    %28 = vector.shape_cast %27 : vector<1x8x4xbf16> to vector<8x4xbf16>
    %c0_15 = arith.constant 0 : index
    %c0_16 = arith.constant 0 : index
    %c36 = arith.constant 36 : index
    %29 = vector.load %arg1[%c0_15, %c0_16, %c36] : memref<1x8x96xbf16, #tpu.memory_space<vmem>>, vector<1x8x4xbf16>
    %30 = vector.shape_cast %29 : vector<1x8x4xbf16> to vector<8x4xbf16>
    %c0_17 = arith.constant 0 : index
    %c0_18 = arith.constant 0 : index
    %c68 = arith.constant 68 : index
    %31 = vector.load %arg1[%c0_17, %c0_18, %c68] : memref<1x8x96xbf16, #tpu.memory_space<vmem>>, vector<1x8x4xbf16>
    %32 = vector.shape_cast %31 : vector<1x8x4xbf16> to vector<8x4xbf16>
    %33 = arith.extf %28 : vector<8x4xbf16> to vector<8x4xf32>
    %cst_19 = arith.constant 5.000000e-01 : f32
    %34 = vector.broadcast %cst_19 : f32 to vector<8x4xf32>
    %35 = arith.mulf %33, %34 : vector<8x4xf32>
    %36 = arith.truncf %35 : vector<8x4xf32> to vector<8x4xbf16>
    %cst_20 = arith.constant dense<0.000000e+00> : vector<8x8xf32>
    %37 = tpu.matmul %36, %30, %cst_20 {dimension_numbers = #tpu.dot_dimension_numbers<[1], [1], [0], [0], [0, 0, 1, 0], [], []>} : vector<8x4xbf16>, vector<8x4xbf16>, vector<8x8xf32> -> vector<8x8xf32>
    %cst_21 = arith.constant dense<0xFF800000> : vector<8xf32>
    %38 = vector.multi_reduction <maximumf>, %37, %cst_21 [1] : vector<8x8xf32> to vector<8xf32>
    %39 = vector.shape_cast %38 : vector<8xf32> to vector<8x1xf32>
    %40 = vector.broadcast %39 : vector<8x1xf32> to vector<8x8xf32>
    %41 = arith.subf %37, %40 : vector<8x8xf32>
    %42 = math.exp %41 : vector<8x8xf32>
    %cst_22 = arith.constant dense<0.000000e+00> : vector<8xf32>
    %43 = vector.multi_reduction <add>, %42, %cst_22 [1] : vector<8x8xf32> to vector<8xf32>
    %44 = vector.shape_cast %43 : vector<8xf32> to vector<8x1xf32>
    %45 = arith.truncf %42 : vector<8x8xf32> to vector<8x8xbf16>
    %cst_23 = arith.constant dense<0.000000e+00> : vector<8x4xf32>
    %46 = tpu.matmul %45, %32, %cst_23 {dimension_numbers = #tpu.dot_dimension_numbers<[1], [0], [0], [1], [0, 0, 1, 1], [], []>} : vector<8x8xbf16>, vector<8x4xbf16>, vector<8x4xf32> -> vector<8x4xf32>
    %47 = tpu.reciprocal %44 {approx = true} : vector<8x1xf32> -> vector<8x1xf32>
    %48 = vector.broadcast %47 : vector<8x1xf32> to vector<8x4xf32>
    %49 = arith.mulf %46, %48 : vector<8x4xf32>
    %50 = arith.truncf %49 : vector<8x4xf32> to vector<8x4xbf16>
    %c0_24 = arith.constant 0 : index
    %c0_25 = arith.constant 0 : index
    %c4_26 = arith.constant 4 : index
    %51 = vector.load %arg2[%c0_24, %c0_25, %c4_26] : memref<1x8x32xbf16, #tpu.memory_space<vmem>>, vector<1x8x4xbf16>
    %52 = vector.shape_cast %51 : vector<1x8x4xbf16> to vector<8x4xbf16>
    %53 = vector.shape_cast %50 : vector<8x4xbf16> to vector<1x8x4xbf16>
    tpu.vector_store %arg2[%c0_24, %c0_25, %c4_26], %53 {strides = array<i32>} : memref<1x8x32xbf16, #tpu.memory_space<vmem>>, vector<1x8x4xbf16>,
    %c0_27 = arith.constant 0 : index
    %c0_28 = arith.constant 0 : index
    %c8 = arith.constant 8 : index
    %54 = vector.load %arg1[%c0_27, %c0_28, %c8] : memref<1x8x96xbf16, #tpu.memory_space<vmem>>, vector<1x8x4xbf16>
    %55 = vector.shape_cast %54 : vector<1x8x4xbf16> to vector<8x4xbf16>
    %c0_29 = arith.constant 0 : index
    %c0_30 = arith.constant 0 : index
    %c40 = arith.constant 40 : index
    %56 = vector.load %arg1[%c0_29, %c0_30, %c40] : memref<1x8x96xbf16, #tpu.memory_space<vmem>>, vector<1x8x4xbf16>
    %57 = vector.shape_cast %56 : vector<1x8x4xbf16> to vector<8x4xbf16>
    %c0_31 = arith.constant 0 : index
    %c0_32 = arith.constant 0 : index
    %c72 = arith.constant 72 : index
    %58 = vector.load %arg1[%c0_31, %c0_32, %c72] : memref<1x8x96xbf16, #tpu.memory_space<vmem>>, vector<1x8x4xbf16>
    %59 = vector.shape_cast %58 : vector<1x8x4xbf16> to vector<8x4xbf16>
    %60 = arith.extf %55 : vector<8x4xbf16> to vector<8x4xf32>
    %cst_33 = arith.constant 5.000000e-01 : f32
    %61 = vector.broadcast %cst_33 : f32 to vector<8x4xf32>
    %62 = arith.mulf %60, %61 : vector<8x4xf32>
    %63 = arith.truncf %62 : vector<8x4xf32> to vector<8x4xbf16>
    %cst_34 = arith.constant dense<0.000000e+00> : vector<8x8xf32>
    %64 = tpu.matmul %63, %57, %cst_34 {dimension_numbers = #tpu.dot_dimension_numbers<[1], [1], [0], [0], [0, 0, 1, 0], [], []>} : vector<8x4xbf16>, vector<8x4xbf16>, vector<8x8xf32> -> vector<8x8xf32>
    %cst_35 = arith.constant dense<0xFF800000> : vector<8xf32>
    %65 = vector.multi_reduction <maximumf>, %64, %cst_35 [1] : vector<8x8xf32> to vector<8xf32>
    %66 = vector.shape_cast %65 : vector<8xf32> to vector<8x1xf32>
    %67 = vector.broadcast %66 : vector<8x1xf32> to vector<8x8xf32>
    %68 = arith.subf %64, %67 : vector<8x8xf32>
    %69 = math.exp %68 : vector<8x8xf32>
    %cst_36 = arith.constant dense<0.000000e+00> : vector<8xf32>
    %70 = vector.multi_reduction <add>, %69, %cst_36 [1] : vector<8x8xf32> to vector<8xf32>
    %71 = vector.shape_cast %70 : vector<8xf32> to vector<8x1xf32>
    %72 = arith.truncf %69 : vector<8x8xf32> to vector<8x8xbf16>
    %cst_37 = arith.constant dense<0.000000e+00> : vector<8x4xf32>
    %73 = tpu.matmul %72, %59, %cst_37 {dimension_numbers = #tpu.dot_dimension_numbers<[1], [0], [0], [1], [0, 0, 1, 1], [], []>} : vector<8x8xbf16>, vector<8x4xbf16>, vector<8x4xf32> -> vector<8x4xf32>
    %74 = tpu.reciprocal %71 {approx = true} : vector<8x1xf32> -> vector<8x1xf32>
    %75 = vector.broadcast %74 : vector<8x1xf32> to vector<8x4xf32>
    %76 = arith.mulf %73, %75 : vector<8x4xf32>
    %77 = arith.truncf %76 : vector<8x4xf32> to vector<8x4xbf16>
    %c0_38 = arith.constant 0 : index
    %c0_39 = arith.constant 0 : index
    %c8_40 = arith.constant 8 : index
    %78 = vector.load %arg2[%c0_38, %c0_39, %c8_40] : memref<1x8x32xbf16, #tpu.memory_space<vmem>>, vector<1x8x4xbf16>
    %79 = vector.shape_cast %78 : vector<1x8x4xbf16> to vector<8x4xbf16>
    %80 = vector.shape_cast %77 : vector<8x4xbf16> to vector<1x8x4xbf16>
    tpu.vector_store %arg2[%c0_38, %c0_39, %c8_40], %80 {strides = array<i32>} : memref<1x8x32xbf16, #tpu.memory_space<vmem>>, vector<1x8x4xbf16>,
    %c0_41 = arith.constant 0 : index
    %c0_42 = arith.constant 0 : index
    %c12 = arith.constant 12 : index
    %81 = vector.load %arg1[%c0_41, %c0_42, %c12] : memref<1x8x96xbf16, #tpu.memory_space<vmem>>, vector<1x8x4xbf16>
    %82 = vector.shape_cast %81 : vector<1x8x4xbf16> to vector<8x4xbf16>
    %c0_43 = arith.constant 0 : index
    %c0_44 = arith.constant 0 : index
    %c44 = arith.constant 44 : index
    %83 = vector.load %arg1[%c0_43, %c0_44, %c44] : memref<1x8x96xbf16, #tpu.memory_space<vmem>>, vector<1x8x4xbf16>
    %84 = vector.shape_cast %83 : vector<1x8x4xbf16> to vector<8x4xbf16>
    %c0_45 = arith.constant 0 : index
    %c0_46 = arith.constant 0 : index
    %c76 = arith.constant 76 : index
    %85 = vector.load %arg1[%c0_45, %c0_46, %c76] : memref<1x8x96xbf16, #tpu.memory_space<vmem>>, vector<1x8x4xbf16>
    %86 = vector.shape_cast %85 : vector<1x8x4xbf16> to vector<8x4xbf16>
    %87 = arith.extf %82 : vector<8x4xbf16> to vector<8x4xf32>
    %cst_47 = arith.constant 5.000000e-01 : f32
    %88 = vector.broadcast %cst_47 : f32 to vector<8x4xf32>
    %89 = arith.mulf %87, %88 : vector<8x4xf32>
    %90 = arith.truncf %89 : vector<8x4xf32> to vector<8x4xbf16>
    %cst_48 = arith.constant dense<0.000000e+00> : vector<8x8xf32>
    %91 = tpu.matmul %90, %84, %cst_48 {dimension_numbers = #tpu.dot_dimension_numbers<[1], [1], [0], [0], [0, 0, 1, 0], [], []>} : vector<8x4xbf16>, vector<8x4xbf16>, vector<8x8xf32> -> vector<8x8xf32>
    %cst_49 = arith.constant dense<0xFF800000> : vector<8xf32>
    %92 = vector.multi_reduction <maximumf>, %91, %cst_49 [1] : vector<8x8xf32> to vector<8xf32>
    %93 = vector.shape_cast %92 : vector<8xf32> to vector<8x1xf32>
    %94 = vector.broadcast %93 : vector<8x1xf32> to vector<8x8xf32>
    %95 = arith.subf %91, %94 : vector<8x8xf32>
    %96 = math.exp %95 : vector<8x8xf32>
    %cst_50 = arith.constant dense<0.000000e+00> : vector<8xf32>
    %97 = vector.multi_reduction <add>, %96, %cst_50 [1] : vector<8x8xf32> to vector<8xf32>
    %98 = vector.shape_cast %97 : vector<8xf32> to vector<8x1xf32>
    %99 = arith.truncf %96 : vector<8x8xf32> to vector<8x8xbf16>
    %cst_51 = arith.constant dense<0.000000e+00> : vector<8x4xf32>
    %100 = tpu.matmul %99, %86, %cst_51 {dimension_numbers = #tpu.dot_dimension_numbers<[1], [0], [0], [1], [0, 0, 1, 1], [], []>} : vector<8x8xbf16>, vector<8x4xbf16>, vector<8x4xf32> -> vector<8x4xf32>
    %101 = tpu.reciprocal %98 {approx = true} : vector<8x1xf32> -> vector<8x1xf32>
    %102 = vector.broadcast %101 : vector<8x1xf32> to vector<8x4xf32>
    %103 = arith.mulf %100, %102 : vector<8x4xf32>
    %104 = arith.truncf %103 : vector<8x4xf32> to vector<8x4xbf16>
    %c0_52 = arith.constant 0 : index
    %c0_53 = arith.constant 0 : index
    %c12_54 = arith.constant 12 : index
    %105 = vector.load %arg2[%c0_52, %c0_53, %c12_54] : memref<1x8x32xbf16, #tpu.memory_space<vmem>>, vector<1x8x4xbf16>
    %106 = vector.shape_cast %105 : vector<1x8x4xbf16> to vector<8x4xbf16>
    %107 = vector.shape_cast %104 : vector<8x4xbf16> to vector<1x8x4xbf16>
    tpu.vector_store %arg2[%c0_52, %c0_53, %c12_54], %107 {strides = array<i32>} : memref<1x8x32xbf16, #tpu.memory_space<vmem>>, vector<1x8x4xbf16>,
    %c0_55 = arith.constant 0 : index
    %c0_56 = arith.constant 0 : index
    %c16 = arith.constant 16 : index
    %108 = vector.load %arg1[%c0_55, %c0_56, %c16] : memref<1x8x96xbf16, #tpu.memory_space<vmem>>, vector<1x8x4xbf16>
    %109 = vector.shape_cast %108 : vector<1x8x4xbf16> to vector<8x4xbf16>
    %c0_57 = arith.constant 0 : index
    %c0_58 = arith.constant 0 : index
    %c48 = arith.constant 48 : index
    %110 = vector.load %arg1[%c0_57, %c0_58, %c48] : memref<1x8x96xbf16, #tpu.memory_space<vmem>>, vector<1x8x4xbf16>
    %111 = vector.shape_cast %110 : vector<1x8x4xbf16> to vector<8x4xbf16>
    %c0_59 = arith.constant 0 : index
    %c0_60 = arith.constant 0 : index
    %c80 = arith.constant 80 : index
    %112 = vector.load %arg1[%c0_59, %c0_60, %c80] : memref<1x8x96xbf16, #tpu.memory_space<vmem>>, vector<1x8x4xbf16>
    %113 = vector.shape_cast %112 : vector<1x8x4xbf16> to vector<8x4xbf16>
    %114 = arith.extf %109 : vector<8x4xbf16> to vector<8x4xf32>
    %cst_61 = arith.constant 5.000000e-01 : f32
    %115 = vector.broadcast %cst_61 : f32 to vector<8x4xf32>
    %116 = arith.mulf %114, %115 : vector<8x4xf32>
    %117 = arith.truncf %116 : vector<8x4xf32> to vector<8x4xbf16>
    %cst_62 = arith.constant dense<0.000000e+00> : vector<8x8xf32>
    %118 = tpu.matmul %117, %111, %cst_62 {dimension_numbers = #tpu.dot_dimension_numbers<[1], [1], [0], [0], [0, 0, 1, 0], [], []>} : vector<8x4xbf16>, vector<8x4xbf16>, vector<8x8xf32> -> vector<8x8xf32>
    %cst_63 = arith.constant dense<0xFF800000> : vector<8xf32>
    %119 = vector.multi_reduction <maximumf>, %118, %cst_63 [1] : vector<8x8xf32> to vector<8xf32>
    %120 = vector.shape_cast %119 : vector<8xf32> to vector<8x1xf32>
    %121 = vector.broadcast %120 : vector<8x1xf32> to vector<8x8xf32>
    %122 = arith.subf %118, %121 : vector<8x8xf32>
    %123 = math.exp %122 : vector<8x8xf32>
    %cst_64 = arith.constant dense<0.000000e+00> : vector<8xf32>
    %124 = vector.multi_reduction <add>, %123, %cst_64 [1] : vector<8x8xf32> to vector<8xf32>
    %125 = vector.shape_cast %124 : vector<8xf32> to vector<8x1xf32>
    %126 = arith.truncf %123 : vector<8x8xf32> to vector<8x8xbf16>
    %cst_65 = arith.constant dense<0.000000e+00> : vector<8x4xf32>
    %127 = tpu.matmul %126, %113, %cst_65 {dimension_numbers = #tpu.dot_dimension_numbers<[1], [0], [0], [1], [0, 0, 1, 1], [], []>} : vector<8x8xbf16>, vector<8x4xbf16>, vector<8x4xf32> -> vector<8x4xf32>
    %128 = tpu.reciprocal %125 {approx = true} : vector<8x1xf32> -> vector<8x1xf32>
    %129 = vector.broadcast %128 : vector<8x1xf32> to vector<8x4xf32>
    %130 = arith.mulf %127, %129 : vector<8x4xf32>
    %131 = arith.truncf %130 : vector<8x4xf32> to vector<8x4xbf16>
    %c0_66 = arith.constant 0 : index
    %c0_67 = arith.constant 0 : index
    %c16_68 = arith.constant 16 : index
    %132 = vector.load %arg2[%c0_66, %c0_67, %c16_68] : memref<1x8x32xbf16, #tpu.memory_space<vmem>>, vector<1x8x4xbf16>
    %133 = vector.shape_cast %132 : vector<1x8x4xbf16> to vector<8x4xbf16>
    %134 = vector.shape_cast %131 : vector<8x4xbf16> to vector<1x8x4xbf16>
    tpu.vector_store %arg2[%c0_66, %c0_67, %c16_68], %134 {strides = array<i32>} : memref<1x8x32xbf16, #tpu.memory_space<vmem>>, vector<1x8x4xbf16>,
    %c0_69 = arith.constant 0 : index
    %c0_70 = arith.constant 0 : index
    %c20 = arith.constant 20 : index
    %135 = vector.load %arg1[%c0_69, %c0_70, %c20] : memref<1x8x96xbf16, #tpu.memory_space<vmem>>, vector<1x8x4xbf16>
    %136 = vector.shape_cast %135 : vector<1x8x4xbf16> to vector<8x4xbf16>
    %c0_71 = arith.constant 0 : index
    %c0_72 = arith.constant 0 : index
    %c52 = arith.constant 52 : index
    %137 = vector.load %arg1[%c0_71, %c0_72, %c52] : memref<1x8x96xbf16, #tpu.memory_space<vmem>>, vector<1x8x4xbf16>
    %138 = vector.shape_cast %137 : vector<1x8x4xbf16> to vector<8x4xbf16>
    %c0_73 = arith.constant 0 : index
    %c0_74 = arith.constant 0 : index
    %c84 = arith.constant 84 : index
    %139 = vector.load %arg1[%c0_73, %c0_74, %c84] : memref<1x8x96xbf16, #tpu.memory_space<vmem>>, vector<1x8x4xbf16>
    %140 = vector.shape_cast %139 : vector<1x8x4xbf16> to vector<8x4xbf16>
    %141 = arith.extf %136 : vector<8x4xbf16> to vector<8x4xf32>
    %cst_75 = arith.constant 5.000000e-01 : f32
    %142 = vector.broadcast %cst_75 : f32 to vector<8x4xf32>
    %143 = arith.mulf %141, %142 : vector<8x4xf32>
    %144 = arith.truncf %143 : vector<8x4xf32> to vector<8x4xbf16>
    %cst_76 = arith.constant dense<0.000000e+00> : vector<8x8xf32>
    %145 = tpu.matmul %144, %138, %cst_76 {dimension_numbers = #tpu.dot_dimension_numbers<[1], [1], [0], [0], [0, 0, 1, 0], [], []>} : vector<8x4xbf16>, vector<8x4xbf16>, vector<8x8xf32> -> vector<8x8xf32>
    %cst_77 = arith.constant dense<0xFF800000> : vector<8xf32>
    %146 = vector.multi_reduction <maximumf>, %145, %cst_77 [1] : vector<8x8xf32> to vector<8xf32>
    %147 = vector.shape_cast %146 : vector<8xf32> to vector<8x1xf32>
    %148 = vector.broadcast %147 : vector<8x1xf32> to vector<8x8xf32>
    %149 = arith.subf %145, %148 : vector<8x8xf32>
    %150 = math.exp %149 : vector<8x8xf32>
    %cst_78 = arith.constant dense<0.000000e+00> : vector<8xf32>
    %151 = vector.multi_reduction <add>, %150, %cst_78 [1] : vector<8x8xf32> to vector<8xf32>
    %152 = vector.shape_cast %151 : vector<8xf32> to vector<8x1xf32>
    %153 = arith.truncf %150 : vector<8x8xf32> to vector<8x8xbf16>
    %cst_79 = arith.constant dense<0.000000e+00> : vector<8x4xf32>
    %154 = tpu.matmul %153, %140, %cst_79 {dimension_numbers = #tpu.dot_dimension_numbers<[1], [0], [0], [1], [0, 0, 1, 1], [], []>} : vector<8x8xbf16>, vector<8x4xbf16>, vector<8x4xf32> -> vector<8x4xf32>
    %155 = tpu.reciprocal %152 {approx = true} : vector<8x1xf32> -> vector<8x1xf32>
    %156 = vector.broadcast %155 : vector<8x1xf32> to vector<8x4xf32>
    %157 = arith.mulf %154, %156 : vector<8x4xf32>
    %158 = arith.truncf %157 : vector<8x4xf32> to vector<8x4xbf16>
    %c0_80 = arith.constant 0 : index
    %c0_81 = arith.constant 0 : index
    %c20_82 = arith.constant 20 : index
    %159 = vector.load %arg2[%c0_80, %c0_81, %c20_82] : memref<1x8x32xbf16, #tpu.memory_space<vmem>>, vector<1x8x4xbf16>
    %160 = vector.shape_cast %159 : vector<1x8x4xbf16> to vector<8x4xbf16>
    %161 = vector.shape_cast %158 : vector<8x4xbf16> to vector<1x8x4xbf16>
    tpu.vector_store %arg2[%c0_80, %c0_81, %c20_82], %161 {strides = array<i32>} : memref<1x8x32xbf16, #tpu.memory_space<vmem>>, vector<1x8x4xbf16>,
    %c0_83 = arith.constant 0 : index
    %c0_84 = arith.constant 0 : index
    %c24 = arith.constant 24 : index
    %162 = vector.load %arg1[%c0_83, %c0_84, %c24] : memref<1x8x96xbf16, #tpu.memory_space<vmem>>, vector<1x8x4xbf16>
    %163 = vector.shape_cast %162 : vector<1x8x4xbf16> to vector<8x4xbf16>
    %c0_85 = arith.constant 0 : index
    %c0_86 = arith.constant 0 : index
    %c56 = arith.constant 56 : index
    %164 = vector.load %arg1[%c0_85, %c0_86, %c56] : memref<1x8x96xbf16, #tpu.memory_space<vmem>>, vector<1x8x4xbf16>
    %165 = vector.shape_cast %164 : vector<1x8x4xbf16> to vector<8x4xbf16>
    %c0_87 = arith.constant 0 : index
    %c0_88 = arith.constant 0 : index
    %c88 = arith.constant 88 : index
    %166 = vector.load %arg1[%c0_87, %c0_88, %c88] : memref<1x8x96xbf16, #tpu.memory_space<vmem>>, vector<1x8x4xbf16>
    %167 = vector.shape_cast %166 : vector<1x8x4xbf16> to vector<8x4xbf16>
    %168 = arith.extf %163 : vector<8x4xbf16> to vector<8x4xf32>
    %cst_89 = arith.constant 5.000000e-01 : f32
    %169 = vector.broadcast %cst_89 : f32 to vector<8x4xf32>
    %170 = arith.mulf %168, %169 : vector<8x4xf32>
    %171 = arith.truncf %170 : vector<8x4xf32> to vector<8x4xbf16>
    %cst_90 = arith.constant dense<0.000000e+00> : vector<8x8xf32>
    %172 = tpu.matmul %171, %165, %cst_90 {dimension_numbers = #tpu.dot_dimension_numbers<[1], [1], [0], [0], [0, 0, 1, 0], [], []>} : vector<8x4xbf16>, vector<8x4xbf16>, vector<8x8xf32> -> vector<8x8xf32>
    %cst_91 = arith.constant dense<0xFF800000> : vector<8xf32>
    %173 = vector.multi_reduction <maximumf>, %172, %cst_91 [1] : vector<8x8xf32> to vector<8xf32>
    %174 = vector.shape_cast %173 : vector<8xf32> to vector<8x1xf32>
    %175 = vector.broadcast %174 : vector<8x1xf32> to vector<8x8xf32>
    %176 = arith.subf %172, %175 : vector<8x8xf32>
    %177 = math.exp %176 : vector<8x8xf32>
    %cst_92 = arith.constant dense<0.000000e+00> : vector<8xf32>
    %178 = vector.multi_reduction <add>, %177, %cst_92 [1] : vector<8x8xf32> to vector<8xf32>
    %179 = vector.shape_cast %178 : vector<8xf32> to vector<8x1xf32>
    %180 = arith.truncf %177 : vector<8x8xf32> to vector<8x8xbf16>
    %cst_93 = arith.constant dense<0.000000e+00> : vector<8x4xf32>
    %181 = tpu.matmul %180, %167, %cst_93 {dimension_numbers = #tpu.dot_dimension_numbers<[1], [0], [0], [1], [0, 0, 1, 1], [], []>} : vector<8x8xbf16>, vector<8x4xbf16>, vector<8x4xf32> -> vector<8x4xf32>
    %182 = tpu.reciprocal %179 {approx = true} : vector<8x1xf32> -> vector<8x1xf32>
    %183 = vector.broadcast %182 : vector<8x1xf32> to vector<8x4xf32>
    %184 = arith.mulf %181, %183 : vector<8x4xf32>
    %185 = arith.truncf %184 : vector<8x4xf32> to vector<8x4xbf16>
    %c0_94 = arith.constant 0 : index
    %c0_95 = arith.constant 0 : index
    %c24_96 = arith.constant 24 : index
    %186 = vector.load %arg2[%c0_94, %c0_95, %c24_96] : memref<1x8x32xbf16, #tpu.memory_space<vmem>>, vector<1x8x4xbf16>
    %187 = vector.shape_cast %186 : vector<1x8x4xbf16> to vector<8x4xbf16>
    %188 = vector.shape_cast %185 : vector<8x4xbf16> to vector<1x8x4xbf16>
    tpu.vector_store %arg2[%c0_94, %c0_95, %c24_96], %188 {strides = array<i32>} : memref<1x8x32xbf16, #tpu.memory_space<vmem>>, vector<1x8x4xbf16>,
    %c0_97 = arith.constant 0 : index
    %c0_98 = arith.constant 0 : index
    %c28 = arith.constant 28 : index
    %189 = vector.load %arg1[%c0_97, %c0_98, %c28] : memref<1x8x96xbf16, #tpu.memory_space<vmem>>, vector<1x8x4xbf16>
    %190 = vector.shape_cast %189 : vector<1x8x4xbf16> to vector<8x4xbf16>
    %c0_99 = arith.constant 0 : index
    %c0_100 = arith.constant 0 : index
    %c60 = arith.constant 60 : index
    %191 = vector.load %arg1[%c0_99, %c0_100, %c60] : memref<1x8x96xbf16, #tpu.memory_space<vmem>>, vector<1x8x4xbf16>
    %192 = vector.shape_cast %191 : vector<1x8x4xbf16> to vector<8x4xbf16>
    %c0_101 = arith.constant 0 : index
    %c0_102 = arith.constant 0 : index
    %c92 = arith.constant 92 : index
    %193 = vector.load %arg1[%c0_101, %c0_102, %c92] : memref<1x8x96xbf16, #tpu.memory_space<vmem>>, vector<1x8x4xbf16>
    %194 = vector.shape_cast %193 : vector<1x8x4xbf16> to vector<8x4xbf16>
    %195 = arith.extf %190 : vector<8x4xbf16> to vector<8x4xf32>
    %cst_103 = arith.constant 5.000000e-01 : f32
    %196 = vector.broadcast %cst_103 : f32 to vector<8x4xf32>
    %197 = arith.mulf %195, %196 : vector<8x4xf32>
    %198 = arith.truncf %197 : vector<8x4xf32> to vector<8x4xbf16>
    %cst_104 = arith.constant dense<0.000000e+00> : vector<8x8xf32>
    %199 = tpu.matmul %198, %192, %cst_104 {dimension_numbers = #tpu.dot_dimension_numbers<[1], [1], [0], [0], [0, 0, 1, 0], [], []>} : vector<8x4xbf16>, vector<8x4xbf16>, vector<8x8xf32> -> vector<8x8xf32>
    %cst_105 = arith.constant dense<0xFF800000> : vector<8xf32>
    %200 = vector.multi_reduction <maximumf>, %199, %cst_105 [1] : vector<8x8xf32> to vector<8xf32>
    %201 = vector.shape_cast %200 : vector<8xf32> to vector<8x1xf32>
    %202 = vector.broadcast %201 : vector<8x1xf32> to vector<8x8xf32>
    %203 = arith.subf %199, %202 : vector<8x8xf32>
    %204 = math.exp %203 : vector<8x8xf32>
    %cst_106 = arith.constant dense<0.000000e+00> : vector<8xf32>
    %205 = vector.multi_reduction <add>, %204, %cst_106 [1] : vector<8x8xf32> to vector<8xf32>
    %206 = vector.shape_cast %205 : vector<8xf32> to vector<8x1xf32>
    %207 = arith.truncf %204 : vector<8x8xf32> to vector<8x8xbf16>
    %cst_107 = arith.constant dense<0.000000e+00> : vector<8x4xf32>
    %208 = tpu.matmul %207, %194, %cst_107 {dimension_numbers = #tpu.dot_dimension_numbers<[1], [0], [0], [1], [0, 0, 1, 1], [], []>} : vector<8x8xbf16>, vector<8x4xbf16>, vector<8x4xf32> -> vector<8x4xf32>
    %209 = tpu.reciprocal %206 {approx = true} : vector<8x1xf32> -> vector<8x1xf32>
    %210 = vector.broadcast %209 : vector<8x1xf32> to vector<8x4xf32>
    %211 = arith.mulf %208, %210 : vector<8x4xf32>
    %212 = arith.truncf %211 : vector<8x4xf32> to vector<8x4xbf16>
    %c0_108 = arith.constant 0 : index
    %c0_109 = arith.constant 0 : index
    %c28_110 = arith.constant 28 : index
    %213 = vector.load %arg2[%c0_108, %c0_109, %c28_110] : memref<1x8x32xbf16, #tpu.memory_space<vmem>>, vector<1x8x4xbf16>
    %214 = vector.shape_cast %213 : vector<1x8x4xbf16> to vector<8x4xbf16>
    %215 = vector.shape_cast %212 : vector<8x4xbf16> to vector<1x8x4xbf16>
    tpu.vector_store %arg2[%c0_108, %c0_109, %c28_110], %215 {strides = array<i32>} : memref<1x8x32xbf16, #tpu.memory_space<vmem>>, vector<1x8x4xbf16>,
    return
  }
  func.func @transform_0(%arg0: i32) -> (i32, i32, i32) {
    %c0_i32 = arith.constant 0 : i32
    %c0_i32_0 = arith.constant 0 : i32
    %c0_i32_1 = arith.constant 0 : i32
    return %arg0, %c0_i32, %c0_i32_0 : i32, i32, i32
  }
  func.func @transform_1(%arg0: i32) -> (i32, i32, i32) {
    %c0_i32 = arith.constant 0 : i32
    %c0_i32_0 = arith.constant 0 : i32
    %c0_i32_1 = arith.constant 0 : i32
    return %arg0, %c0_i32, %c0_i32_0 : i32, i32, i32
  }
}

module attributes {stable_mosaic.version = 11 : i64} {
  func.func @_linear_kernel(%arg0: i32, %arg1: memref<16x32xbf16, #tpu.memory_space<vmem>>, %arg2: memref<32x32xbf16, #tpu.memory_space<vmem>>, %arg3: memref<1x32xf32, #tpu.memory_space<vmem>>, %arg4: memref<16x32xf32, #tpu.memory_space<vmem>>) attributes {dimension_semantics = [#tpu.dimension_semantics<parallel>], iteration_bounds = array<i64: 1>, scalar_prefetch = 0 : i64, scratch_operands = 0 : i64, tpu.core_type = #tpu.core_type<tc>, window_params = [{transform_indices = @transform_0, window_bounds = array<i64: 16, 32>}, {pipeline_mode = #tpu.pipeline_mode<synchronous>, transform_indices = @transform_1, window_bounds = array<i64: 32, 32>}, {pipeline_mode = #tpu.pipeline_mode<synchronous>, transform_indices = @transform_2, window_bounds = array<i64: 1, 32>}, {transform_indices = @transform_3, window_bounds = array<i64: 16, 32>}]} {
    %c0 = arith.constant 0 : index
    %c0_0 = arith.constant 0 : index
    %0 = vector.load %arg1[%c0, %c0_0] : memref<16x32xbf16, #tpu.memory_space<vmem>>, vector<16x32xbf16>
    %c0_1 = arith.constant 0 : index
    %c0_2 = arith.constant 0 : index
    %1 = vector.load %arg2[%c0_1, %c0_2] : memref<32x32xbf16, #tpu.memory_space<vmem>>, vector<32x32xbf16>
    %cst = arith.constant dense<0.000000e+00> : vector<16x32xf32>
    %2 = tpu.matmul %0, %1, %cst {dimension_numbers = #tpu.dot_dimension_numbers<[1], [0], [0], [1], [0, 0, 1, 1], [], []>} : vector<16x32xbf16>, vector<32x32xbf16>, vector<16x32xf32> -> vector<16x32xf32>
    %c0_3 = arith.constant 0 : index
    %c0_4 = arith.constant 0 : index
    %3 = vector.load %arg3[%c0_3, %c0_4] : memref<1x32xf32, #tpu.memory_space<vmem>>, vector<1x32xf32>
    %4 = vector.broadcast %3 : vector<1x32xf32> to vector<16x32xf32>
    %5 = arith.addf %2, %4 : vector<16x32xf32>
    %c0_5 = arith.constant 0 : index
    %c0_6 = arith.constant 0 : index
    %6 = vector.load %arg4[%c0_5, %c0_6] : memref<16x32xf32, #tpu.memory_space<vmem>>, vector<16x32xf32>
    tpu.vector_store %arg4[%c0_5, %c0_6], %5 {strides = array<i32>} : memref<16x32xf32, #tpu.memory_space<vmem>>, vector<16x32xf32>,
    return
  }
  func.func @transform_0(%arg0: i32) -> (i32, i32) {
    %c0_i32 = arith.constant 0 : i32
    %c0_i32_0 = arith.constant 0 : i32
    return %arg0, %c0_i32 : i32, i32
  }
  func.func @transform_1(%arg0: i32) -> (i32, i32) {
    %c0_i32 = arith.constant 0 : i32
    %c0_i32_0 = arith.constant 0 : i32
    %c0_i32_1 = arith.constant 0 : i32
    return %c0_i32, %c0_i32_0 : i32, i32
  }
  func.func @transform_2(%arg0: i32) -> (i32, i32) {
    %c0_i32 = arith.constant 0 : i32
    %c0_i32_0 = arith.constant 0 : i32
    %c0_i32_1 = arith.constant 0 : i32
    return %c0_i32, %c0_i32_0 : i32, i32
  }
  func.func @transform_3(%arg0: i32) -> (i32, i32) {
    %c0_i32 = arith.constant 0 : i32
    %c0_i32_0 = arith.constant 0 : i32
    return %arg0, %c0_i32 : i32, i32
  }
}

</mosaic_0001>

<llo_original>
// kernel: attention_forward.3
$region0: #{attention_forward.3}
  #allocation0 [shape = 'u32[]', space=smem, size = 0x4, offset = 0x4, fixed_abs, tag = 'smem constant byte address 0x4 - core index']
  #allocation1 [shape = 'u32[144,128]{1,0:T(1,128)}', space=vmem, size = 0x12000, scoped, tag = 'internal scratch']
  %s0 = inlined_call_operand.vmem [shape: f32[16,32], index: 0, kind: input, shape index: {}]
  %s1 = inlined_call_operand.vmem [shape: bf16[32,96], index: 1, kind: input, shape index: {}]
  %s2 = inlined_call_operand.vmem [shape: f32[1,96], index: 2, kind: input, shape index: {}]
  %s3 = inlined_call_operand.vmem [shape: bf16[16,96], index: 3, kind: output, shape index: {}]
  %s4 = sld [smem:[#allocation0]]
  $region22: #{attention_forward.3} parent=0
    _
  %s6 = ssub.s32 1, %s4
  %s7 = scalar_select 0, %s6, %s4
  // Predicated region
  $region2: #{attention_forward.3} parent=0 // pred_check
    _
  $region3: #{attention_forward.3} parent=0 // pred_check_branch
    %9 = sbr.rel (0) target = $region5
  $region4: #{attention_forward.3} parent=0 // pred_region
    _
  $region5: #{attention_forward.3} parent=0 // pred_fallthru
    _
  // Predicated region
  $region6: #{attention_forward.3} parent=0 // pred_check
    _
  $region7: #{attention_forward.3} parent=0 // pred_check_branch
    %11 = sbr.rel (0) target = $region9
  $region8: #{attention_forward.3} parent=0 // pred_region
    _
  $region9: #{attention_forward.3} parent=0 // pred_fallthru
    _
  // Predicated region
  $region10: #{attention_forward.3} parent=0 // pred_check
    _
  $region11: #{attention_forward.3} parent=0 // pred_check_branch
    %13 = sbr.rel (0) target = $region13
  $region12: #{attention_forward.3} parent=0 // pred_region
    _
  $region13: #{attention_forward.3} parent=0 // pred_fallthru
    _
  %v15 = vld [vmem:[%s0] sm:$0xff]
  %v16 = vld [vmem:[%s0 + $0x8] sm:$0xff]
  %v17 = vpack.c.bf16 %v16, %v15
  %v18 = vld [vmem:[%s1] sm:$0xf]
  %v19 = vld [vmem:[%s1 + $0x4] sm:$0xf]
  %v20 = vld [vmem:[%s1 + $0x8] sm:$0xf]
  %v21 = vld [vmem:[%s1 + $0xc] sm:$0xf]
  %v22 = vld [vmem:[%s2] sm:$0x1]
  %v24 = vlaneseq
  %v25 = vshrl.u32 %v24, 7
  %v26 = vsub.s32 0, %v25
  %v27 = vrot.slane %v22, %v26
  %v33 = vunpack.c.l.b16 %v18
  %v34 = vunpack.c.l.b16 %v19
  %v35 = vunpack.c.l.b16 %v20
  %v36 = vunpack.c.l.b16 %v21
  %v37 = vpack.c.b16 %v34, %v33
  %v38 = vpack.c.b16 %v36, %v35
  %vm41 = vcmask 261120
  %v43 = vsel %vm41, %v17, 0
  %45 = vmatprep.subr.bf16.mxu0 0
  %46 = vmatpush1.bf16.msra.mxu0 %v37
  %47 = vmatprep.subr.bf16.mxu0 0
  %48 = vmatpush1.bf16.msra.mxu0 %v38
  %49 = vmatprep.subr.bf16.mxu0 0
  %50 = vmatpush1.bf16.msra.mxu0 0
  %51 = vmatprep.subr.bf16.mxu0 0
  %52 = vmatpush1.bf16.msra.mxu0 0
  %53 = vmatprep.subr.bf16.mxu0 0
  %54 = vmatpush1.bf16.msra.mxu0 0
  %55 = vmatprep.subr.bf16.mxu0 0
  %56 = vmatpush1.bf16.msra.mxu0 0
  %57 = vmatprep.subr.bf16.mxu0 0
  %58 = vmatpush1.bf16.msra.mxu0 0
  %59 = vmatprep.subr.bf16.mxu0 0
  %60 = vmatpush1.bf16.msra.mxu0 0
  %61 = vmatprep.subr.bf16.mxu0 0
  %62 = vmatpush1.bf16.msra.mxu0 0
  %63 = vmatprep.subr.bf16.mxu0 0
  %64 = vmatpush1.bf16.msra.mxu0 0
  %65 = vmatprep.subr.bf16.mxu0 0
  %66 = vmatpush1.bf16.msra.mxu0 0
  %67 = vmatprep.subr.bf16.mxu0 0
  %68 = vmatpush1.bf16.msra.mxu0 0
  %69 = vmatprep.subr.bf16.mxu0 0
  %70 = vmatpush1.bf16.msra.mxu0 0
  %71 = vmatprep.subr.bf16.mxu0 0
  %72 = vmatpush1.bf16.msra.mxu0 0
  %73 = vmatprep.subr.bf16.mxu0 0
  %74 = vmatpush1.bf16.msra.mxu0 0
  %75 = vmatprep.subr.bf16.mxu0 0
  %76 = vmatpush1.bf16.msra.mxu0 0
  %77 = vmatprep.mubr.bf16.mxu0 0
  %78 = vmatmul.mubr.bf16.gmra.mrb[0].mxu0 %v43
  %v79 = vpop.f32.mrb[0].mxu0
  %v80 = vadd.f32 %v27, %v79
  %v81 = vpop.f32.mrb[0].mxu0
  %v82 = vpop.f32.mrb[0].mxu0
  %v83 = vadd.f32 %v27, %v82
  %v84 = vpop.f32.mrb[0].mxu0
  %85 = vdwg.mxu0
  %v86 = vpack.c.bf16 %v83, %v80
  %v88 = vunpack.c.l.b16 %v86
  %v89 = vunpack.c.h.b16 %v86
  %v90 = vpack.c.b16 %v88, %v88
  %v91 = vpack.c.b16 %v89, %v89
  %vm94 = vcmask 781312
  %95 = vst.msk [vmem:[%s3] sm:$0xf] %vm94, %v90
  %96 = vst.msk [vmem:[%s3 + $0x4] sm:$0xf] %vm94, %v91
  // Predicated region
  $region14: #{attention_forward.3} parent=0 // pred_check
    _
  $region15: #{attention_forward.3} parent=0 // pred_check_branch
    %98 = sbr.rel (0) target = $region17
  $region16: #{attention_forward.3} parent=0 // pred_region
    _
  $region17: #{attention_forward.3} parent=0 // pred_fallthru
    _
  // Predicated region
  $region18: #{attention_forward.3} parent=0 // pred_check
    _
  $region19: #{attention_forward.3} parent=0 // pred_check_branch
    %100 = sbr.rel (0) target = $region21
  $region20: #{attention_forward.3} parent=0 // pred_region
    _
  $region21: #{attention_forward.3} parent=0 // pred_fallthru
    _

// kernel: attention_forward.5
$region0: #{attention_forward.5}
  #allocation0 [shape = 'u32[]', space=smem, size = 0x4, offset = 0x4, fixed_abs, tag = 'smem constant byte address 0x4 - core index']
  #allocation1 [shape = 'u32[144,128]{1,0:T(1,128)}', space=vmem, size = 0x12000, scoped, tag = 'internal scratch']
  %s0 = inlined_call_operand.vmem [shape: bf16[16,32], index: 0, kind: input, shape index: {}]
  %s1 = inlined_call_operand.vmem [shape: bf16[32,32], index: 1, kind: input, shape index: {}]
  %s2 = inlined_call_operand.vmem [shape: f32[1,32], index: 2, kind: input, shape index: {}]
  %s3 = inlined_call_operand.hbm [shape: f32[16,32], index: 3, kind: output, shape index: {}]
  %s4 = sld [smem:[#allocation0]]
  $region22: #{attention_forward.5} parent=0
    _
  %s6 = ssub.s32 1, %s4
  %s7 = scalar_select 0, %s6, %s4
  $region1: #{attention_forward.5} parent=0
    #allocation2 [shape = 'u8[8192]{0}', space=vmem, size = 0x2000, scoped, tag = 'output window, operand 0, single buffered']
    #allocation3 [shape = 's32[1]{0}', space=sflag, size = 0x4, scoped, tag = 'scoped memory for attention_forward.5']
    %8 = vsyncpa [#allocation3], 0
    // Predicated region
    $region2: #{attention_forward.5} parent=1 // pred_check
      _
    $region3: #{attention_forward.5} parent=1 // pred_check_branch
      %10 = sbr.rel (0) target = $region5
    $region4: #{attention_forward.5} parent=1 // pred_region
      _
    $region5: #{attention_forward.5} parent=1 // pred_fallthru
      _
    // Predicated region
    $region6: #{attention_forward.5} parent=1 // pred_check
      _
    $region7: #{attention_forward.5} parent=1 // pred_check_branch
      %12 = sbr.rel (0) target = $region9
    $region8: #{attention_forward.5} parent=1 // pred_region
      _
    $region9: #{attention_forward.5} parent=1 // pred_fallthru
      _
    // Predicated region
    $region10: #{attention_forward.5} parent=1 // pred_check
      _
    $region11: #{attention_forward.5} parent=1 // pred_check_branch
      %14 = sbr.rel (0) target = $region13
    $region12: #{attention_forward.5} parent=1 // pred_region
      _
    $region13: #{attention_forward.5} parent=1 // pred_fallthru
      _
    %v16 = vld [vmem:[%s0] sm:$0xf]
    %v17 = vld [vmem:[%s0 + $0x4] sm:$0xf]
    %v18 = vld [vmem:[%s1] sm:$0xf]
    %v19 = vld [vmem:[%s1 + $0x4] sm:$0xf]
    %v20 = vld [vmem:[%s1 + $0x8] sm:$0xf]
    %v21 = vld [vmem:[%s1 + $0xc] sm:$0xf]
    %v22 = vld [vmem:[%s2] sm:$0x1]
    %v24 = vlaneseq
    %v25 = vshrl.u32 %v24, 7
    %v26 = vsub.s32 0, %v25
    %v27 = vrot.slane %v22, %v26
    %v31 = vunpack.c.l.b16 %v16
    %v32 = vunpack.c.l.b16 %v17
    %v33 = vpack.c.b16 %v32, %v31
    %v38 = vunpack.c.l.b16 %v18
    %v39 = vunpack.c.l.b16 %v19
    %v40 = vunpack.c.l.b16 %v20
    %v41 = vunpack.c.l.b16 %v21
    %v42 = vpack.c.b16 %v39, %v38
    %v43 = vpack.c.b16 %v41, %v40
    %vm46 = vcmask 261120
    %v48 = vsel %vm46, %v33, 0
    %50 = vmatprep.subr.bf16.mxu0 0
    %51 = vmatpush1.bf16.msra.mxu0 %v42
    %52 = vmatprep.subr.bf16.mxu0 0
    %53 = vmatpush1.bf16.msra.mxu0 %v43
    %54 = vmatprep.subr.bf16.mxu0 0
    %55 = vmatpush1.bf16.msra.mxu0 0
    %56 = vmatprep.subr.bf16.mxu0 0
    %57 = vmatpush1.bf16.msra.mxu0 0
    %58 = vmatprep.subr.bf16.mxu0 0
    %59 = vmatpush1.bf16.msra.mxu0 0
    %60 = vmatprep.subr.bf16.mxu0 0
    %61 = vmatpush1.bf16.msra.mxu0 0
    %62 = vmatprep.subr.bf16.mxu0 0
    %63 = vmatpush1.bf16.msra.mxu0 0
    %64 = vmatprep.subr.bf16.mxu0 0
    %65 = vmatpush1.bf16.msra.mxu0 0
    %66 = vmatprep.subr.bf16.mxu0 0
    %67 = vmatpush1.bf16.msra.mxu0 0
    %68 = vmatprep.subr.bf16.mxu0 0
    %69 = vmatpush1.bf16.msra.mxu0 0
    %70 = vmatprep.subr.bf16.mxu0 0
    %71 = vmatpush1.bf16.msra.mxu0 0
    %72 = vmatprep.subr.bf16.mxu0 0
    %73 = vmatpush1.bf16.msra.mxu0 0
    %74 = vmatprep.subr.bf16.mxu0 0
    %75 = vmatpush1.bf16.msra.mxu0 0
    %76 = vmatprep.subr.bf16.mxu0 0
    %77 = vmatpush1.bf16.msra.mxu0 0
    %78 = vmatprep.subr.bf16.mxu0 0
    %79 = vmatpush1.bf16.msra.mxu0 0
    %80 = vmatprep.subr.bf16.mxu0 0
    %81 = vmatpush1.bf16.msra.mxu0 0
    %82 = vmatprep.mubr.bf16.mxu0 0
    %83 = vmatmul.mubr.bf16.gmra.mrb[0].mxu0 %v48
    %v84 = vpop.f32.mrb[0].mxu0
    %v85 = vadd.f32 %v27, %v84
    %v86 = vpop.f32.mrb[0].mxu0
    %v87 = vpop.f32.mrb[0].mxu0
    %v88 = vadd.f32 %v27, %v87
    %v89 = vpop.f32.mrb[0].mxu0
    %90 = vdwg.mxu0
    %91 = vst.msk [vmem:[#allocation2] sm:$0xff] %vm46, %v85
    %92 = vst.msk [vmem:[#allocation2 + $0x8] sm:$0xff] %vm46, %v88
    // Predicated region
    $region14: #{attention_forward.5} parent=1 // pred_check
      _
    $region15: #{attention_forward.5} parent=1 // pred_check_branch
      %94 = sbr.rel (0) target = $region17
    $region16: #{attention_forward.5} parent=1 // pred_region
      %s96 = ssub.s32 256, 256
      %97 = vsyncadd [#allocation3], %s96
      %s98 = sshll.u32 [#allocation2], 4
      %s99 = int_to_ptr.vmem [resolvable:$true] %s98
      %104 = dma.vmem_to_hbm [thread:$0]  %s99, 256, %s3, [#allocation3], 128, 128, 8
    $region17: #{attention_forward.5} parent=1 // pred_fallthru
      _
    // Predicated region
    $region18: #{attention_forward.5} parent=1 // pred_check
      _
    $region19: #{attention_forward.5} parent=1 // pred_check_branch
      %106 = sbr.rel (0) target = $region21
    $region20: #{attention_forward.5} parent=1 // pred_region
      %107 = dma.done [#allocation3], 256
    $region21: #{attention_forward.5} parent=1 // pred_fallthru
      _
    %108 = vsyncpa [#allocation3], 1

// kernel: attention_forward.4
$region0: #{attention_forward.4}
  #allocation0 [shape = 'u32[]', space=smem, size = 0x4, offset = 0x4, fixed_abs, tag = 'smem constant byte address 0x4 - core index']
  #allocation1 [shape = 'u32[144,128]{1,0:T(1,128)}', space=vmem, size = 0x12000, scoped, tag = 'internal scratch']
  %s0 = inlined_call_operand.vmem [shape: bf16[2,8,96], index: 0, kind: input, shape index: {}]
  %s1 = inlined_call_operand.vmem [shape: bf16[2,8,32], index: 1, kind: output, shape index: {}]
  %s2 = sld [smem:[#allocation0]]
  $region37: #{attention_forward.4} parent=0
    _
  %s4 = ssub.s32 1, %s2
  %s5 = scalar_select 0, %s4, %s2
  loop: start=0, step=1, limit=4
  $region2: #{attention_forward.4} parent=0 // loop_pre_header
    _
  $region3: #{attention_forward.4} parent=0 // loop_header
    %s7 = sphi 0, %s11
    %p8 = scmp.ge.s32.totalorder %s7, 4
    %s17 = sphi 0, %s19
    %s20 = sphi 0, %s17
    %s21 = sphi 0, %s20
    %s37 = sphi 0, %s21
    %s43 = sphi 0, %s45
    %s46 = sphi 0, %s43
    %s47 = sphi 0, %s46
    %s63 = sphi 0, %s47
  $region4: #{attention_forward.4} parent=0 // loop_header_branch
    %10 = sbr.rel (%p8) target = $region8
  $region5: #{attention_forward.4} parent=0 // loop_body
    %s12 = ssub.s32 %s7, 1
    %s13 = ssub.s32 %s7, 2
    %s14 = sadd.s32 %s7, 1
    %s15 = ssub.s32 %s7, %s14
    %p16 = scmp.eq.s32.totalorder %s15, 0
    %s18 = sadd.s32 %s17, 1
    %s19 = scalar_select %p16, %s17, %s18
    %p22 = pneg %p16
    %p23 = scmp.eq.s32.totalorder %s7, 1
    %p24 = por %p22, %p23
    %p25 = scmp.ne.s32.totalorder %s17, %s20
    %p26 = scmp.eq.s32.totalorder %s7, 0
    %p27 = por %p25, %p26
    %p28 = scmp.ne.s32.totalorder %s17, %s20
    %p29 = scmp.eq.s32.totalorder %s12, 1
    %p30 = por %p28, %p29
    %p31 = scmp.ne.s32.totalorder %s20, %s21
    %p32 = scmp.eq.s32.totalorder %s12, 0
    %p33 = por %p31, %p32
    %p34 = scmp.ne.s32.totalorder %s20, %s21
    %p35 = scmp.eq.s32.totalorder %s13, 1
    %p36 = por %p34, %p35
    %p38 = scmp.ne.s32.totalorder %s21, %s37
    %p39 = scmp.eq.s32.totalorder %s13, 0
    %p40 = por %p38, %p39
    %s41 = ssub.s32 %s7, %s14
    %p42 = scmp.eq.s32.totalorder %s41, 0
    %s44 = sadd.s32 %s43, 1
    %s45 = scalar_select %p42, %s43, %s44
    %p48 = pneg %p42
    %p49 = scmp.eq.s32.totalorder %s7, 1
    %p50 = por %p48, %p49
    %p51 = scmp.ne.s32.totalorder %s43, %s46
    %p52 = scmp.eq.s32.totalorder %s7, 0
    %p53 = por %p51, %p52
    %p54 = scmp.ne.s32.totalorder %s43, %s46
    %p55 = scmp.eq.s32.totalorder %s12, 1
    %p56 = por %p54, %p55
    %p57 = scmp.ne.s32.totalorder %s46, %s47
    %p58 = scmp.eq.s32.totalorder %s12, 0
    %p59 = por %p57, %p58
    %p60 = scmp.ne.s32.totalorder %s46, %s47
    %p61 = scmp.eq.s32.totalorder %s13, 1
    %p62 = por %p60, %p61
    %p64 = scmp.ne.s32.totalorder %s47, %s63
    %p65 = scmp.eq.s32.totalorder %s13, 0
    %p66 = por %p64, %p65
    %p67 = scmp.le.s32.totalorder 1, %s7
    %p68 = scmp.lt.s32.totalorder %s7, 3
    %p69 = pnand %p67, %p68
    %p70 = pneg %p69
    // Predicated region
    $region9: #{attention_forward.4} parent=5 // pred_check
      _
    $region10: #{attention_forward.4} parent=5 // pred_check_branch
      %72 = sbr.rel (%p69) target = $region12
    $region11: #{attention_forward.4} parent=5 // pred_region
      %s73 = ssub.s32 %s7, 1
    $region12: #{attention_forward.4} parent=5 // pred_fallthru
      _
    %p74 = scmp.lt.s32.totalorder %s7, 2
    // Predicated region
    $region13: #{attention_forward.4} parent=5 // pred_check
      %p75 = pneg %p74
    $region14: #{attention_forward.4} parent=5 // pred_check_branch
      %77 = sbr.rel (%p75) target = $region16
    $region15: #{attention_forward.4} parent=5 // pred_region
      // Predicated region
      $region17: #{attention_forward.4} parent=15 // pred_check
        %p78 = pneg %p27
      $region18: #{attention_forward.4} parent=15 // pred_check_branch
        %80 = sbr.rel (%p78) target = $region20
      $region19: #{attention_forward.4} parent=15 // pred_region
        %p81 = scmp.lt.s32.totalorder %s7, 1
        %s82 = scalar_select %p81, %s7, 1
        %s83 = smul.addr %s82, 4
        %s84 = scalar_lea.vmem %s0, %s83
      $region20: #{attention_forward.4} parent=15 // pred_fallthru
        _
    $region16: #{attention_forward.4} parent=5 // pred_fallthru
      _
    %p85 = scmp.le.s32.totalorder 1, %s7
    %p86 = scmp.lt.s32.totalorder %s7, 3
    %p87 = pnand %p85, %p86
    %p88 = pneg %p87
    // Predicated region
    $region21: #{attention_forward.4} parent=5 // pred_check
      _
    $region22: #{attention_forward.4} parent=5 // pred_check_branch
      %90 = sbr.rel (%p87) target = $region24
    $region23: #{attention_forward.4} parent=5 // pred_region
      %s91 = ssub.s32 %s7, 1
      %p92 = scmp.lt.s32.totalorder %s12, 1
      %s93 = scalar_select %p92, %s12, 1
      %s94 = smul.addr %s93, 4
      %s95 = scalar_lea.vmem %s0, %s94
      %p96 = pneg %p33
      %p97 = pneg %p30
      %p98 = pneg %p59
      %p99 = pneg %p56
      %p100 = scmp.lt.s32.totalorder %s12, 1
      %s101 = scalar_select %p100, %s12, 1
      %s102 = smul.addr %s101, 4
      %s103 = scalar_lea.vmem %s1, %s102
      %p104 = scmp.lt.s32.totalorder %s12, 1
      %s105 = scalar_select %p104, %s12, 1
      %s106 = smul.addr %s105, 4
      %s107 = scalar_lea.vmem %s0, %s106
      %p108 = scmp.lt.s32.totalorder %s12, 1
      %s109 = scalar_select %p108, %s12, 1
      %s110 = smul.addr %s109, 4
      %s111 = scalar_lea.vmem %s1, %s110
      %v113 = vld [vmem:[%s107] sm:$0xf]
      %v114 = vunpack.c.l.bf16 %v113
      %v115 = vmul.f32 %v114, 0.5
      %v116 = vpack.c.bf16 %v115, %v115
      %v118 = vunpack.c.l.b16 %v113
      %v119 = vpack.c.b16 %v118, %v118
      %120 = vrot.lane.b32.xlu0 %v119, 96
      %v121 = vpop.permute.xlu0 %120
      %vm122 = vcmask 31744
      %v124 = vsel %vm122, %v116, 0
      %v127 = vsel %vm122, %v121, 0
      %129 = vmatprep.subr.bf16.mxu0 0
      %130 = vmatpush1.bf16.xpose.msra.mxu0 %v127
      %131 = vmatprep.subr.bf16.mxu0 0
      %132 = vmatpush1.bf16.xpose.msra.mxu0 0
      %133 = vmatprep.subr.bf16.mxu0 0
      %134 = vmatpush1.bf16.xpose.msra.mxu0 0
      %135 = vmatprep.subr.bf16.mxu0 0
      %136 = vmatpush1.bf16.xpose.msra.mxu0 0
      %137 = vmatprep.subr.bf16.mxu0 0
      %138 = vmatpush1.bf16.xpose.msra.mxu0 0
      %139 = vmatprep.subr.bf16.mxu0 0
      %140 = vmatpush1.bf16.xpose.msra.mxu0 0
      %141 = vmatprep.subr.bf16.mxu0 0
      %142 = vmatpush1.bf16.xpose.msra.mxu0 0
      %143 = vmatprep.subr.bf16.mxu0 0
      %144 = vmatpush1.bf16.xpose.msra.mxu0 0
      %145 = vmatprep.subr.bf16.mxu0 0
      %146 = vmatpush1.bf16.xpose.msra.mxu0 0
      %147 = vmatprep.subr.bf16.mxu0 0
      %148 = vmatpush1.bf16.xpose.msra.mxu0 0
      %149 = vmatprep.subr.bf16.mxu0 0
      %150 = vmatpush1.bf16.xpose.msra.mxu0 0
      %151 = vmatprep.subr.bf16.mxu0 0
      %152 = vmatpush1.bf16.xpose.msra.mxu0 0
      %153 = vmatprep.subr.bf16.mxu0 0
      %154 = vmatpush1.bf16.xpose.msra.mxu0 0
      %155 = vmatprep.subr.bf16.mxu0 0
      %156 = vmatpush1.bf16.xpose.msra.mxu0 0
      %157 = vmatprep.subr.bf16.mxu0 0
      %158 = vmatpush1.bf16.xpose.msra.mxu0 0
      %159 = vmatprep.subr.bf16.mxu0 0
      %160 = vmatpush1.bf16.xpose.msra.mxu0 0
      %161 = vmatprep.mubr.bf16.mxu0 0
      %162 = vmatmul.mubr.bf16.gmra.mrb[0].mxu0 %v124
      %v163 = vpop.f32.mrb[0].mxu0
      %v164 = vadd.f32 0.0, %v163
      %v165 = vpop.f32.mrb[0].mxu0
      %v166 = vpop.f32.mrb[0].mxu0
      %v167 = vpop.f32.mrb[0].mxu0
      %168 = vdwg.mxu0
      %vm169 = vcmask 64512
      %v170 = vsel %vm169, %v164, -inf
      %171 = vmax.xlane.f32.xlu0 %v170
      %v172 = vpop.xlane.xlu0 %171
      %v173 = vsub.f32 %v164, %v172
      %v174 = vmul.f32 %v173, 1.442695
      %v175 = vpow.pop %v174
      %v176 = vsel %vm169, %v175, 0.0
      %177 = vadd.xlane.f32.xlu0 %v176
      %v178 = vpop.xlane.xlu0 %177
      %v179 = vpack.c.bf16 %v175, %v175
      %180 = vrot.lane.b32.xlu0 %v119, 64
      %v181 = vpop.permute.xlu0 %180
      %v183 = vsel %vm169, %v179, 0
      %vm185 = vcmask 1043456
      %v187 = vsel %vm185, %v181, 0
      %189 = vmatprep.subr.bf16.mxu0 0
      %190 = vmatpush1.bf16.msra.mxu0 %v187
      %191 = vmatprep.subr.bf16.mxu0 0
      %192 = vmatpush1.bf16.msra.mxu0 0
      %193 = vmatprep.subr.bf16.mxu0 0
      %194 = vmatpush1.bf16.msra.mxu0 0
      %195 = vmatprep.subr.bf16.mxu0 0
      %196 = vmatpush1.bf16.msra.mxu0 0
      %197 = vmatprep.subr.bf16.mxu0 0
      %198 = vmatpush1.bf16.msra.mxu0 0
      %199 = vmatprep.subr.bf16.mxu0 0
      %200 = vmatpush1.bf16.msra.mxu0 0
      %201 = vmatprep.subr.bf16.mxu0 0
      %202 = vmatpush1.bf16.msra.mxu0 0
      %203 = vmatprep.subr.bf16.mxu0 0
      %204 = vmatpush1.bf16.msra.mxu0 0
      %205 = vmatprep.subr.bf16.mxu0 0
      %206 = vmatpush1.bf16.msra.mxu0 0
      %207 = vmatprep.subr.bf16.mxu0 0
      %208 = vmatpush1.bf16.msra.mxu0 0
      %209 = vmatprep.subr.bf16.mxu0 0
      %210 = vmatpush1.bf16.msra.mxu0 0
      %211 = vmatprep.subr.bf16.mxu0 0
      %212 = vmatpush1.bf16.msra.mxu0 0
      %213 = vmatprep.subr.bf16.mxu0 0
      %214 = vmatpush1.bf16.msra.mxu0 0
      %215 = vmatprep.subr.bf16.mxu0 0
      %216 = vmatpush1.bf16.msra.mxu0 0
      %217 = vmatprep.subr.bf16.mxu0 0
      %218 = vmatpush1.bf16.msra.mxu0 0
      %219 = vmatprep.subr.bf16.mxu0 0
      %220 = vmatpush1.bf16.msra.mxu0 0
      %221 = vmatprep.mubr.bf16.mxu0 0
      %222 = vmatmul.mubr.bf16.gmra.mrb[0].mxu0 %v183
      %v223 = vpop.f32.mrb[0].mxu0
      %v224 = vadd.f32 0.0, %v223
      %v225 = vpop.f32.mrb[0].mxu0
      %v226 = vpop.f32.mrb[0].mxu0
      %v227 = vpop.f32.mrb[0].mxu0
      %228 = vdwg.mxu0
      %v229 = vrcp.pop %v178
      %v230 = vmul.f32 %v224, %v229
      %v231 = vpack.c.bf16 %v230, %v230
      %vm232 = vcmask 27648
      %233 = vst.msk [vmem:[%s111] sm:$0xf] %vm232, %v231
      %v234 = vld [vmem:[%s107] sm:$0xf]
      %v235 = vunpack.c.l.bf16 %v234
      %v236 = vmul.f32 %v235, 0.5
      %v237 = vpack.c.bf16 %v236, %v236
      %239 = vrot.lane.b32.xlu0 %v237, 124
      %v240 = vpop.permute.xlu0 %239
      %v242 = vunpack.c.l.b16 %v234
      %v243 = vpack.c.b16 %v242, %v242
      %244 = vrot.lane.b32.xlu0 %v243, 92
      %v245 = vpop.permute.xlu0 %244
      %v247 = vsel %vm122, %v240, 0
      %v250 = vsel %vm122, %v245, 0
      %252 = vmatprep.subr.bf16.mxu0 0
      %253 = vmatpush1.bf16.xpose.msra.mxu0 %v250
      %254 = vmatprep.subr.bf16.mxu0 0
      %255 = vmatpush1.bf16.xpose.msra.mxu0 0
      %256 = vmatprep.subr.bf16.mxu0 0
      %257 = vmatpush1.bf16.xpose.msra.mxu0 0
      %258 = vmatprep.subr.bf16.mxu0 0
      %259 = vmatpush1.bf16.xpose.msra.mxu0 0
      %260 = vmatprep.subr.bf16.mxu0 0
      %261 = vmatpush1.bf16.xpose.msra.mxu0 0
      %262 = vmatprep.subr.bf16.mxu0 0
      %263 = vmatpush1.bf16.xpose.msra.mxu0 0
      %264 = vmatprep.subr.bf16.mxu0 0
      %265 = vmatpush1.bf16.xpose.msra.mxu0 0
      %266 = vmatprep.subr.bf16.mxu0 0
      %267 = vmatpush1.bf16.xpose.msra.mxu0 0
      %268 = vmatprep.subr.bf16.mxu0 0
      %269 = vmatpush1.bf16.xpose.msra.mxu0 0
      %270 = vmatprep.subr.bf16.mxu0 0
      %271 = vmatpush1.bf16.xpose.msra.mxu0 0
      %272 = vmatprep.subr.bf16.mxu0 0
      %273 = vmatpush1.bf16.xpose.msra.mxu0 0
      %274 = vmatprep.subr.bf16.mxu0 0
      %275 = vmatpush1.bf16.xpose.msra.mxu0 0
      %276 = vmatprep.subr.bf16.mxu0 0
      %277 = vmatpush1.bf16.xpose.msra.mxu0 0
      %278 = vmatprep.subr.bf16.mxu0 0
      %279 = vmatpush1.bf16.xpose.msra.mxu0 0
      %280 = vmatprep.subr.bf16.mxu0 0
      %281 = vmatpush1.bf16.xpose.msra.mxu0 0
      %282 = vmatprep.subr.bf16.mxu0 0
      %283 = vmatpush1.bf16.xpose.msra.mxu0 0
      %284 = vmatprep.mubr.bf16.mxu0 0
      %285 = vmatmul.mubr.bf16.gmra.mrb[0].mxu0 %v247
      %v286 = vpop.f32.mrb[0].mxu0
      %v287 = vadd.f32 0.0, %v286
      %v288 = vpop.f32.mrb[0].mxu0
      %v289 = vpop.f32.mrb[0].mxu0
      %v290 = vpop.f32.mrb[0].mxu0
      %291 = vdwg.mxu0
      %v292 = vsel %vm169, %v287, -inf
      %293 = vmax.xlane.f32.xlu0 %v292
      %v294 = vpop.xlane.xlu0 %293
      %v295 = vsub.f32 %v287, %v294
      %v296 = vmul.f32 %v295, 1.442695
      %v297 = vpow.pop %v296
      %v298 = vsel %vm169, %v297, 0.0
      %299 = vadd.xlane.f32.xlu0 %v298
      %v300 = vpop.xlane.xlu0 %299
      %v301 = vpack.c.bf16 %v297, %v297
      %302 = vrot.lane.b32.xlu0 %v243, 60
      %v303 = vpop.permute.xlu0 %302
      %v305 = vsel %vm169, %v301, 0
      %v308 = vsel %vm185, %v303, 0
      %310 = vmatprep.subr.bf16.mxu0 0
      %311 = vmatpush1.bf16.msra.mxu0 %v308
      %312 = vmatprep.subr.bf16.mxu0 0
      %313 = vmatpush1.bf16.msra.mxu0 0
      %314 = vmatprep.subr.bf16.mxu0 0
      %315 = vmatpush1.bf16.msra.mxu0 0
      %316 = vmatprep.subr.bf16.mxu0 0
      %317 = vmatpush1.bf16.msra.mxu0 0
      %318 = vmatprep.subr.bf16.mxu0 0
      %319 = vmatpush1.bf16.msra.mxu0 0
      %320 = vmatprep.subr.bf16.mxu0 0
      %321 = vmatpush1.bf16.msra.mxu0 0
      %322 = vmatprep.subr.bf16.mxu0 0
      %323 = vmatpush1.bf16.msra.mxu0 0
      %324 = vmatprep.subr.bf16.mxu0 0
      %325 = vmatpush1.bf16.msra.mxu0 0
      %326 = vmatprep.subr.bf16.mxu0 0
      %327 = vmatpush1.bf16.msra.mxu0 0
      %328 = vmatprep.subr.bf16.mxu0 0
      %329 = vmatpush1.bf16.msra.mxu0 0
      %330 = vmatprep.subr.bf16.mxu0 0
      %331 = vmatpush1.bf16.msra.mxu0 0
      %332 = vmatprep.subr.bf16.mxu0 0
      %333 = vmatpush1.bf16.msra.mxu0 0
      %334 = vmatprep.subr.bf16.mxu0 0
      %335 = vmatpush1.bf16.msra.mxu0 0
      %336 = vmatprep.subr.bf16.mxu0 0
      %337 = vmatpush1.bf16.msra.mxu0 0
      %338 = vmatprep.subr.bf16.mxu0 0
      %339 = vmatpush1.bf16.msra.mxu0 0
      %340 = vmatprep.subr.bf16.mxu0 0
      %341 = vmatpush1.bf16.msra.mxu0 0
      %342 = vmatprep.mubr.bf16.mxu0 0
      %343 = vmatmul.mubr.bf16.gmra.mrb[0].mxu0 %v305
      %v344 = vpop.f32.mrb[0].mxu0
      %v345 = vadd.f32 0.0, %v344
      %v346 = vpop.f32.mrb[0].mxu0
      %v347 = vpop.f32.mrb[0].mxu0
      %v348 = vpop.f32.mrb[0].mxu0
      %349 = vdwg.mxu0
      %v350 = vrcp.pop %v300
      %v351 = vmul.f32 %v345, %v350
      %v352 = vpack.c.bf16 %v351, %v351
      %v354 = vunpack.c.l.b16 %v352
      %v355 = vpack.c.b16 %v354, %v354
      %356 = vrot.lane.b32.xlu0 %v355, 4
      %v357 = vpop.permute.xlu0 %356
      %vm359 = vcmask 60448
      %360 = vst.msk [vmem:[%s111] sm:$0xf] %vm359, %v357
      %v361 = vld [vmem:[%s107] sm:$0xf]
      %v362 = vunpack.c.l.bf16 %v361
      %v363 = vmul.f32 %v362, 0.5
      %v364 = vpack.c.bf16 %v363, %v363
      %366 = vrot.lane.b32.xlu0 %v364, 120
      %v367 = vpop.permute.xlu0 %366
      %v369 = vunpack.c.l.b16 %v361
      %v370 = vpack.c.b16 %v369, %v369
      %371 = vrot.lane.b32.xlu0 %v370, 88
      %v372 = vpop.permute.xlu0 %371
      %v374 = vsel %vm122, %v367, 0
      %v377 = vsel %vm122, %v372, 0
      %379 = vmatprep.subr.bf16.mxu0 0
      %380 = vmatpush1.bf16.xpose.msra.mxu0 %v377
      %381 = vmatprep.subr.bf16.mxu0 0
      %382 = vmatpush1.bf16.xpose.msra.mxu0 0
      %383 = vmatprep.subr.bf16.mxu0 0
      %384 = vmatpush1.bf16.xpose.msra.mxu0 0
      %385 = vmatprep.subr.bf16.mxu0 0
      %386 = vmatpush1.bf16.xpose.msra.mxu0 0
      %387 = vmatprep.subr.bf16.mxu0 0
      %388 = vmatpush1.bf16.xpose.msra.mxu0 0
      %389 = vmatprep.subr.bf16.mxu0 0
      %390 = vmatpush1.bf16.xpose.msra.mxu0 0
      %391 = vmatprep.subr.bf16.mxu0 0
      %392 = vmatpush1.bf16.xpose.msra.mxu0 0
      %393 = vmatprep.subr.bf16.mxu0 0
      %394 = vmatpush1.bf16.xpose.msra.mxu0 0
      %395 = vmatprep.subr.bf16.mxu0 0
      %396 = vmatpush1.bf16.xpose.msra.mxu0 0
      %397 = vmatprep.subr.bf16.mxu0 0
      %398 = vmatpush1.bf16.xpose.msra.mxu0 0
      %399 = vmatprep.subr.bf16.mxu0 0
      %400 = vmatpush1.bf16.xpose.msra.mxu0 0
      %401 = vmatprep.subr.bf16.mxu0 0
      %402 = vmatpush1.bf16.xpose.msra.mxu0 0
      %403 = vmatprep.subr.bf16.mxu0 0
      %404 = vmatpush1.bf16.xpose.msra.mxu0 0
      %405 = vmatprep.subr.bf16.mxu0 0
      %406 = vmatpush1.bf16.xpose.msra.mxu0 0
      %407 = vmatprep.subr.bf16.mxu0 0
      %408 = vmatpush1.bf16.xpose.msra.mxu0 0
      %409 = vmatprep.subr.bf16.mxu0 0
      %410 = vmatpush1.bf16.xpose.msra.mxu0 0
      %411 = vmatprep.mubr.bf16.mxu0 0
      %412 = vmatmul.mubr.bf16.gmra.mrb[0].mxu0 %v374
      %v413 = vpop.f32.mrb[0].mxu0
      %v414 = vadd.f32 0.0, %v413
      %v415 = vpop.f32.mrb[0].mxu0
      %v416 = vpop.f32.mrb[0].mxu0
      %v417 = vpop.f32.mrb[0].mxu0
      %418 = vdwg.mxu0
      %v419 = vsel %vm169, %v414, -inf
      %420 = vmax.xlane.f32.xlu0 %v419
      %v421 = vpop.xlane.xlu0 %420
      %v422 = vsub.f32 %v414, %v421
      %v423 = vmul.f32 %v422, 1.442695
      %v424 = vpow.pop %v423
      %v425 = vsel %vm169, %v424, 0.0
      %426 = vadd.xlane.f32.xlu0 %v425
      %v427 = vpop.xlane.xlu0 %426
      %v428 = vpack.c.bf16 %v424, %v424
      %429 = vrot.lane.b32.xlu0 %v370, 56
      %v430 = vpop.permute.xlu0 %429
      %v432 = vsel %vm169, %v428, 0
      %v435 = vsel %vm185, %v430, 0
      %437 = vmatprep.subr.bf16.mxu0 0
      %438 = vmatpush1.bf16.msra.mxu0 %v435
      %439 = vmatprep.subr.bf16.mxu0 0
      %440 = vmatpush1.bf16.msra.mxu0 0
      %441 = vmatprep.subr.bf16.mxu0 0
      %442 = vmatpush1.bf16.msra.mxu0 0
      %443 = vmatprep.subr.bf16.mxu0 0
      %444 = vmatpush1.bf16.msra.mxu0 0
      %445 = vmatprep.subr.bf16.mxu0 0
      %446 = vmatpush1.bf16.msra.mxu0 0
      %447 = vmatprep.subr.bf16.mxu0 0
      %448 = vmatpush1.bf16.msra.mxu0 0
      %449 = vmatprep.subr.bf16.mxu0 0
      %450 = vmatpush1.bf16.msra.mxu0 0
      %451 = vmatprep.subr.bf16.mxu0 0
      %452 = vmatpush1.bf16.msra.mxu0 0
      %453 = vmatprep.subr.bf16.mxu0 0
      %454 = vmatpush1.bf16.msra.mxu0 0
      %455 = vmatprep.subr.bf16.mxu0 0
      %456 = vmatpush1.bf16.msra.mxu0 0
      %457 = vmatprep.subr.bf16.mxu0 0
      %458 = vmatpush1.bf16.msra.mxu0 0
      %459 = vmatprep.subr.bf16.mxu0 0
      %460 = vmatpush1.bf16.msra.mxu0 0
      %461 = vmatprep.subr.bf16.mxu0 0
      %462 = vmatpush1.bf16.msra.mxu0 0
      %463 = vmatprep.subr.bf16.mxu0 0
      %464 = vmatpush1.bf16.msra.mxu0 0
      %465 = vmatprep.subr.bf16.mxu0 0
      %466 = vmatpush1.bf16.msra.mxu0 0
      %467 = vmatprep.subr.bf16.mxu0 0
      %468 = vmatpush1.bf16.msra.mxu0 0
      %469 = vmatprep.mubr.bf16.mxu0 0
      %470 = vmatmul.mubr.bf16.gmra.mrb[0].mxu0 %v432
      %v471 = vpop.f32.mrb[0].mxu0
      %v472 = vadd.f32 0.0, %v471
      %v473 = vpop.f32.mrb[0].mxu0
      %v474 = vpop.f32.mrb[0].mxu0
      %v475 = vpop.f32.mrb[0].mxu0
      %476 = vdwg.mxu0
      %v477 = vrcp.pop %v427
      %v478 = vmul.f32 %v472, %v477
      %v479 = vpack.c.bf16 %v478, %v478
      %v481 = vunpack.c.l.b16 %v479
      %v482 = vpack.c.b16 %v481, %v481
      %483 = vrot.lane.b32.xlu0 %v482, 8
      %v484 = vpop.permute.xlu0 %483
      %vm486 = vcmask 93248
      %487 = vst.msk [vmem:[%s111] sm:$0xf] %vm486, %v484
      %v488 = vld [vmem:[%s107] sm:$0xf]
      %v489 = vunpack.c.l.bf16 %v488
      %v490 = vmul.f32 %v489, 0.5
      %v491 = vpack.c.bf16 %v490, %v490
      %493 = vrot.lane.b32.xlu0 %v491, 116
      %v494 = vpop.permute.xlu0 %493
      %v496 = vunpack.c.l.b16 %v488
      %v497 = vpack.c.b16 %v496, %v496
      %498 = vrot.lane.b32.xlu0 %v497, 84
      %v499 = vpop.permute.xlu0 %498
      %v501 = vsel %vm122, %v494, 0
      %v504 = vsel %vm122, %v499, 0
      %506 = vmatprep.subr.bf16.mxu0 0
      %507 = vmatpush1.bf16.xpose.msra.mxu0 %v504
      %508 = vmatprep.subr.bf16.mxu0 0
      %509 = vmatpush1.bf16.xpose.msra.mxu0 0
      %510 = vmatprep.subr.bf16.mxu0 0
      %511 = vmatpush1.bf16.xpose.msra.mxu0 0
      %512 = vmatprep.subr.bf16.mxu0 0
      %513 = vmatpush1.bf16.xpose.msra.mxu0 0
      %514 = vmatprep.subr.bf16.mxu0 0
      %515 = vmatpush1.bf16.xpose.msra.mxu0 0
      %516 = vmatprep.subr.bf16.mxu0 0
      %517 = vmatpush1.bf16.xpose.msra.mxu0 0
      %518 = vmatprep.subr.bf16.mxu0 0
      %519 = vmatpush1.bf16.xpose.msra.mxu0 0
      %520 = vmatprep.subr.bf16.mxu0 0
      %521 = vmatpush1.bf16.xpose.msra.mxu0 0
      %522 = vmatprep.subr.bf16.mxu0 0
      %523 = vmatpush1.bf16.xpose.msra.mxu0 0
      %524 = vmatprep.subr.bf16.mxu0 0
      %525 = vmatpush1.bf16.xpose.msra.mxu0 0
      %526 = vmatprep.subr.bf16.mxu0 0
      %527 = vmatpush1.bf16.xpose.msra.mxu0 0
      %528 = vmatprep.subr.bf16.mxu0 0
      %529 = vmatpush1.bf16.xpose.msra.mxu0 0
      %530 = vmatprep.subr.bf16.mxu0 0
      %531 = vmatpush1.bf16.xpose.msra.mxu0 0
      %532 = vmatprep.subr.bf16.mxu0 0
      %533 = vmatpush1.bf16.xpose.msra.mxu0 0
      %534 = vmatprep.subr.bf16.mxu0 0
      %535 = vmatpush1.bf16.xpose.msra.mxu0 0
      %536 = vmatprep.subr.bf16.mxu0 0
      %537 = vmatpush1.bf16.xpose.msra.mxu0 0
      %538 = vmatprep.mubr.bf16.mxu0 0
      %539 = vmatmul.mubr.bf16.gmra.mrb[0].mxu0 %v501
      %v540 = vpop.f32.mrb[0].mxu0
      %v541 = vadd.f32 0.0, %v540
      %v542 = vpop.f32.mrb[0].mxu0
      %v543 = vpop.f32.mrb[0].mxu0
      %v544 = vpop.f32.mrb[0].mxu0
      %545 = vdwg.mxu0
      %v546 = vsel %vm169, %v541, -inf
      %547 = vmax.xlane.f32.xlu0 %v546
      %v548 = vpop.xlane.xlu0 %547
      %v549 = vsub.f32 %v541, %v548
      %v550 = vmul.f32 %v549, 1.442695
      %v551 = vpow.pop %v550
      %v552 = vsel %vm169, %v551, 0.0
      %553 = vadd.xlane.f32.xlu0 %v552
      %v554 = vpop.xlane.xlu0 %553
      %v555 = vpack.c.bf16 %v551, %v551
      %556 = vrot.lane.b32.xlu0 %v497, 52
      %v557 = vpop.permute.xlu0 %556
      %v559 = vsel %vm169, %v555, 0
      %v562 = vsel %vm185, %v557, 0
      %564 = vmatprep.subr.bf16.mxu0 0
      %565 = vmatpush1.bf16.msra.mxu0 %v562
      %566 = vmatprep.subr.bf16.mxu0 0
      %567 = vmatpush1.bf16.msra.mxu0 0
      %568 = vmatprep.subr.bf16.mxu0 0
      %569 = vmatpush1.bf16.msra.mxu0 0
      %570 = vmatprep.subr.bf16.mxu0 0
      %571 = vmatpush1.bf16.msra.mxu0 0
      %572 = vmatprep.subr.bf16.mxu0 0
      %573 = vmatpush1.bf16.msra.mxu0 0
      %574 = vmatprep.subr.bf16.mxu0 0
      %575 = vmatpush1.bf16.msra.mxu0 0
      %576 = vmatprep.subr.bf16.mxu0 0
      %577 = vmatpush1.bf16.msra.mxu0 0
      %578 = vmatprep.subr.bf16.mxu0 0
      %579 = vmatpush1.bf16.msra.mxu0 0
      %580 = vmatprep.subr.bf16.mxu0 0
      %581 = vmatpush1.bf16.msra.mxu0 0
      %582 = vmatprep.subr.bf16.mxu0 0
      %583 = vmatpush1.bf16.msra.mxu0 0
      %584 = vmatprep.subr.bf16.mxu0 0
      %585 = vmatpush1.bf16.msra.mxu0 0
      %586 = vmatprep.subr.bf16.mxu0 0
      %587 = vmatpush1.bf16.msra.mxu0 0
      %588 = vmatprep.subr.bf16.mxu0 0
      %589 = vmatpush1.bf16.msra.mxu0 0
      %590 = vmatprep.subr.bf16.mxu0 0
      %591 = vmatpush1.bf16.msra.mxu0 0
      %592 = vmatprep.subr.bf16.mxu0 0
      %593 = vmatpush1.bf16.msra.mxu0 0
      %594 = vmatprep.subr.bf16.mxu0 0
      %595 = vmatpush1.bf16.msra.mxu0 0
      %596 = vmatprep.mubr.bf16.mxu0 0
      %597 = vmatmul.mubr.bf16.gmra.mrb[0].mxu0 %v559
      %v598 = vpop.f32.mrb[0].mxu0
      %v599 = vadd.f32 0.0, %v598
      %v600 = vpop.f32.mrb[0].mxu0
      %v601 = vpop.f32.mrb[0].mxu0
      %v602 = vpop.f32.mrb[0].mxu0
      %603 = vdwg.mxu0
      %v604 = vrcp.pop %v554
      %v605 = vmul.f32 %v599, %v604
      %v606 = vpack.c.bf16 %v605, %v605
      %v608 = vunpack.c.l.b16 %v606
      %v609 = vpack.c.b16 %v608, %v608
      %610 = vrot.lane.b32.xlu0 %v609, 12
      %v611 = vpop.permute.xlu0 %610
      %vm613 = vcmask 126048
      %614 = vst.msk [vmem:[%s111] sm:$0xf] %vm613, %v611
      %v615 = vld [vmem:[%s107] sm:$0xf]
      %v616 = vunpack.c.l.bf16 %v615
      %v617 = vmul.f32 %v616, 0.5
      %v618 = vpack.c.bf16 %v617, %v617
      %620 = vrot.lane.b32.xlu0 %v618, 112
      %v621 = vpop.permute.xlu0 %620
      %v623 = vunpack.c.l.b16 %v615
      %v624 = vpack.c.b16 %v623, %v623
      %625 = vrot.lane.b32.xlu0 %v624, 80
      %v626 = vpop.permute.xlu0 %625
      %v628 = vsel %vm122, %v621, 0
      %v631 = vsel %vm122, %v626, 0
      %633 = vmatprep.subr.bf16.mxu0 0
      %634 = vmatpush1.bf16.xpose.msra.mxu0 %v631
      %635 = vmatprep.subr.bf16.mxu0 0
      %636 = vmatpush1.bf16.xpose.msra.mxu0 0
      %637 = vmatprep.subr.bf16.mxu0 0
      %638 = vmatpush1.bf16.xpose.msra.mxu0 0
      %639 = vmatprep.subr.bf16.mxu0 0
      %640 = vmatpush1.bf16.xpose.msra.mxu0 0
      %641 = vmatprep.subr.bf16.mxu0 0
      %642 = vmatpush1.bf16.xpose.msra.mxu0 0
      %643 = vmatprep.subr.bf16.mxu0 0
      %644 = vmatpush1.bf16.xpose.msra.mxu0 0
      %645 = vmatprep.subr.bf16.mxu0 0
      %646 = vmatpush1.bf16.xpose.msra.mxu0 0
      %647 = vmatprep.subr.bf16.mxu0 0
      %648 = vmatpush1.bf16.xpose.msra.mxu0 0
      %649 = vmatprep.subr.bf16.mxu0 0
      %650 = vmatpush1.bf16.xpose.msra.mxu0 0
      %651 = vmatprep.subr.bf16.mxu0 0
      %652 = vmatpush1.bf16.xpose.msra.mxu0 0
      %653 = vmatprep.subr.bf16.mxu0 0
      %654 = vmatpush1.bf16.xpose.msra.mxu0 0
      %655 = vmatprep.subr.bf16.mxu0 0
      %656 = vmatpush1.bf16.xpose.msra.mxu0 0
      %657 = vmatprep.subr.bf16.mxu0 0
      %658 = vmatpush1.bf16.xpose.msra.mxu0 0
      %659 = vmatprep.subr.bf16.mxu0 0
      %660 = vmatpush1.bf16.xpose.msra.mxu0 0
      %661 = vmatprep.subr.bf16.mxu0 0
      %662 = vmatpush1.bf16.xpose.msra.mxu0 0
      %663 = vmatprep.subr.bf16.mxu0 0
      %664 = vmatpush1.bf16.xpose.msra.mxu0 0
      %665 = vmatprep.mubr.bf16.mxu0 0
      %666 = vmatmul.mubr.bf16.gmra.mrb[0].mxu0 %v628
      %v667 = vpop.f32.mrb[0].mxu0
      %v668 = vadd.f32 0.0, %v667
      %v669 = vpop.f32.mrb[0].mxu0
      %v670 = vpop.f32.mrb[0].mxu0
      %v671 = vpop.f32.mrb[0].mxu0
      %672 = vdwg.mxu0
      %v673 = vsel %vm169, %v668, -inf
      %674 = vmax.xlane.f32.xlu0 %v673
      %v675 = vpop.xlane.xlu0 %674
      %v676 = vsub.f32 %v668, %v675
      %v677 = vmul.f32 %v676, 1.442695
      %v678 = vpow.pop %v677
      %v679 = vsel %vm169, %v678, 0.0
      %680 = vadd.xlane.f32.xlu0 %v679
      %v681 = vpop.xlane.xlu0 %680
      %v682 = vpack.c.bf16 %v678, %v678
      %683 = vrot.lane.b32.xlu0 %v624, 48
      %v684 = vpop.permute.xlu0 %683
      %v686 = vsel %vm169, %v682, 0
      %v689 = vsel %vm185, %v684, 0
      %691 = vmatprep.subr.bf16.mxu0 0
      %692 = vmatpush1.bf16.msra.mxu0 %v689
      %693 = vmatprep.subr.bf16.mxu0 0
      %694 = vmatpush1.bf16.msra.mxu0 0
      %695 = vmatprep.subr.bf16.mxu0 0
      %696 = vmatpush1.bf16.msra.mxu0 0
      %697 = vmatprep.subr.bf16.mxu0 0
      %698 = vmatpush1.bf16.msra.mxu0 0
      %699 = vmatprep.subr.bf16.mxu0 0
      %700 = vmatpush1.bf16.msra.mxu0 0
      %701 = vmatprep.subr.bf16.mxu0 0
      %702 = vmatpush1.bf16.msra.mxu0 0
      %703 = vmatprep.subr.bf16.mxu0 0
      %704 = vmatpush1.bf16.msra.mxu0 0
      %705 = vmatprep.subr.bf16.mxu0 0
      %706 = vmatpush1.bf16.msra.mxu0 0
      %707 = vmatprep.subr.bf16.mxu0 0
      %708 = vmatpush1.bf16.msra.mxu0 0
      %709 = vmatprep.subr.bf16.mxu0 0
      %710 = vmatpush1.bf16.msra.mxu0 0
      %711 = vmatprep.subr.bf16.mxu0 0
      %712 = vmatpush1.bf16.msra.mxu0 0
      %713 = vmatprep.subr.bf16.mxu0 0
      %714 = vmatpush1.bf16.msra.mxu0 0
      %715 = vmatprep.subr.bf16.mxu0 0
      %716 = vmatpush1.bf16.msra.mxu0 0
      %717 = vmatprep.subr.bf16.mxu0 0
      %718 = vmatpush1.bf16.msra.mxu0 0
      %719 = vmatprep.subr.bf16.mxu0 0
      %720 = vmatpush1.bf16.msra.mxu0 0
      %721 = vmatprep.subr.bf16.mxu0 0
      %722 = vmatpush1.bf16.msra.mxu0 0
      %723 = vmatprep.mubr.bf16.mxu0 0
      %724 = vmatmul.mubr.bf16.gmra.mrb[0].mxu0 %v686
      %v725 = vpop.f32.mrb[0].mxu0
      %v726 = vadd.f32 0.0, %v725
      %v727 = vpop.f32.mrb[0].mxu0
      %v728 = vpop.f32.mrb[0].mxu0
      %v729 = vpop.f32.mrb[0].mxu0
      %730 = vdwg.mxu0
      %v731 = vrcp.pop %v681
      %v732 = vmul.f32 %v726, %v731
      %v733 = vpack.c.bf16 %v732, %v732
      %v735 = vunpack.c.l.b16 %v733
      %v736 = vpack.c.b16 %v735, %v735
      %737 = vrot.lane.b32.xlu0 %v736, 16
      %v738 = vpop.permute.xlu0 %737
      %vm740 = vcmask 158848
      %741 = vst.msk [vmem:[%s111] sm:$0xf] %vm740, %v738
      %v742 = vld [vmem:[%s107] sm:$0xf]
      %v743 = vunpack.c.l.bf16 %v742
      %v744 = vmul.f32 %v743, 0.5
      %v745 = vpack.c.bf16 %v744, %v744
      %747 = vrot.lane.b32.xlu0 %v745, 108
      %v748 = vpop.permute.xlu0 %747
      %v750 = vunpack.c.l.b16 %v742
      %v751 = vpack.c.b16 %v750, %v750
      %752 = vrot.lane.b32.xlu0 %v751, 76
      %v753 = vpop.permute.xlu0 %752
      %v755 = vsel %vm122, %v748, 0
      %v758 = vsel %vm122, %v753, 0
      %760 = vmatprep.subr.bf16.mxu0 0
      %761 = vmatpush1.bf16.xpose.msra.mxu0 %v758
      %762 = vmatprep.subr.bf16.mxu0 0
      %763 = vmatpush1.bf16.xpose.msra.mxu0 0
      %764 = vmatprep.subr.bf16.mxu0 0
      %765 = vmatpush1.bf16.xpose.msra.mxu0 0
      %766 = vmatprep.subr.bf16.mxu0 0
      %767 = vmatpush1.bf16.xpose.msra.mxu0 0
      %768 = vmatprep.subr.bf16.mxu0 0
      %769 = vmatpush1.bf16.xpose.msra.mxu0 0
      %770 = vmatprep.subr.bf16.mxu0 0
      %771 = vmatpush1.bf16.xpose.msra.mxu0 0
      %772 = vmatprep.subr.bf16.mxu0 0
      %773 = vmatpush1.bf16.xpose.msra.mxu0 0
      %774 = vmatprep.subr.bf16.mxu0 0
      %775 = vmatpush1.bf16.xpose.msra.mxu0 0
      %776 = vmatprep.subr.bf16.mxu0 0
      %777 = vmatpush1.bf16.xpose.msra.mxu0 0
      %778 = vmatprep.subr.bf16.mxu0 0
      %779 = vmatpush1.bf16.xpose.msra.mxu0 0
      %780 = vmatprep.subr.bf16.mxu0 0
      %781 = vmatpush1.bf16.xpose.msra.mxu0 0
      %782 = vmatprep.subr.bf16.mxu0 0
      %783 = vmatpush1.bf16.xpose.msra.mxu0 0
      %784 = vmatprep.subr.bf16.mxu0 0
      %785 = vmatpush1.bf16.xpose.msra.mxu0 0
      %786 = vmatprep.subr.bf16.mxu0 0
      %787 = vmatpush1.bf16.xpose.msra.mxu0 0
      %788 = vmatprep.subr.bf16.mxu0 0
      %789 = vmatpush1.bf16.xpose.msra.mxu0 0
      %790 = vmatprep.subr.bf16.mxu0 0
      %791 = vmatpush1.bf16.xpose.msra.mxu0 0
      %792 = vmatprep.mubr.bf16.mxu0 0
      %793 = vmatmul.mubr.bf16.gmra.mrb[0].mxu0 %v755
      %v794 = vpop.f32.mrb[0].mxu0
      %v795 = vadd.f32 0.0, %v794
      %v796 = vpop.f32.mrb[0].mxu0
      %v797 = vpop.f32.mrb[0].mxu0
      %v798 = vpop.f32.mrb[0].mxu0
      %799 = vdwg.mxu0
      %v800 = vsel %vm169, %v795, -inf
      %801 = vmax.xlane.f32.xlu0 %v800
      %v802 = vpop.xlane.xlu0 %801
      %v803 = vsub.f32 %v795, %v802
      %v804 = vmul.f32 %v803, 1.442695
      %v805 = vpow.pop %v804
      %v806 = vsel %vm169, %v805, 0.0
      %807 = vadd.xlane.f32.xlu0 %v806
      %v808 = vpop.xlane.xlu0 %807
      %v809 = vpack.c.bf16 %v805, %v805
      %810 = vrot.lane.b32.xlu0 %v751, 44
      %v811 = vpop.permute.xlu0 %810
      %v813 = vsel %vm169, %v809, 0
      %v816 = vsel %vm185, %v811, 0
      %818 = vmatprep.subr.bf16.mxu0 0
      %819 = vmatpush1.bf16.msra.mxu0 %v816
      %820 = vmatprep.subr.bf16.mxu0 0
      %821 = vmatpush1.bf16.msra.mxu0 0
      %822 = vmatprep.subr.bf16.mxu0 0
      %823 = vmatpush1.bf16.msra.mxu0 0
      %824 = vmatprep.subr.bf16.mxu0 0
      %825 = vmatpush1.bf16.msra.mxu0 0
      %826 = vmatprep.subr.bf16.mxu0 0
      %827 = vmatpush1.bf16.msra.mxu0 0
      %828 = vmatprep.subr.bf16.mxu0 0
      %829 = vmatpush1.bf16.msra.mxu0 0
      %830 = vmatprep.subr.bf16.mxu0 0
      %831 = vmatpush1.bf16.msra.mxu0 0
      %832 = vmatprep.subr.bf16.mxu0 0
      %833 = vmatpush1.bf16.msra.mxu0 0
      %834 = vmatprep.subr.bf16.mxu0 0
      %835 = vmatpush1.bf16.msra.mxu0 0
      %836 = vmatprep.subr.bf16.mxu0 0
      %837 = vmatpush1.bf16.msra.mxu0 0
      %838 = vmatprep.subr.bf16.mxu0 0
      %839 = vmatpush1.bf16.msra.mxu0 0
      %840 = vmatprep.subr.bf16.mxu0 0
      %841 = vmatpush1.bf16.msra.mxu0 0
      %842 = vmatprep.subr.bf16.mxu0 0
      %843 = vmatpush1.bf16.msra.mxu0 0
      %844 = vmatprep.subr.bf16.mxu0 0
      %845 = vmatpush1.bf16.msra.mxu0 0
      %846 = vmatprep.subr.bf16.mxu0 0
      %847 = vmatpush1.bf16.msra.mxu0 0
      %848 = vmatprep.subr.bf16.mxu0 0
      %849 = vmatpush1.bf16.msra.mxu0 0
      %850 = vmatprep.mubr.bf16.mxu0 0
      %851 = vmatmul.mubr.bf16.gmra.mrb[0].mxu0 %v813
      %v852 = vpop.f32.mrb[0].mxu0
      %v853 = vadd.f32 0.0, %v852
      %v854 = vpop.f32.mrb[0].mxu0
      %v855 = vpop.f32.mrb[0].mxu0
      %v856 = vpop.f32.mrb[0].mxu0
      %857 = vdwg.mxu0
      %v858 = vrcp.pop %v808
      %v859 = vmul.f32 %v853, %v858
      %v860 = vpack.c.bf16 %v859, %v859
      %v862 = vunpack.c.l.b16 %v860
      %v863 = vpack.c.b16 %v862, %v862
      %864 = vrot.lane.b32.xlu0 %v863, 20
      %v865 = vpop.permute.xlu0 %864
      %vm867 = vcmask 191648
      %868 = vst.msk [vmem:[%s111] sm:$0xf] %vm867, %v865
      %v869 = vld [vmem:[%s107] sm:$0xf]
      %v870 = vunpack.c.l.bf16 %v869
      %v871 = vmul.f32 %v870, 0.5
      %v872 = vpack.c.bf16 %v871, %v871
      %874 = vrot.lane.b32.xlu0 %v872, 104
      %v875 = vpop.permute.xlu0 %874
      %v877 = vunpack.c.l.b16 %v869
      %v878 = vpack.c.b16 %v877, %v877
      %879 = vrot.lane.b32.xlu0 %v878, 72
      %v880 = vpop.permute.xlu0 %879
      %v882 = vsel %vm122, %v875, 0
      %v885 = vsel %vm122, %v880, 0
      %887 = vmatprep.subr.bf16.mxu0 0
      %888 = vmatpush1.bf16.xpose.msra.mxu0 %v885
      %889 = vmatprep.subr.bf16.mxu0 0
      %890 = vmatpush1.bf16.xpose.msra.mxu0 0
      %891 = vmatprep.subr.bf16.mxu0 0
      %892 = vmatpush1.bf16.xpose.msra.mxu0 0
      %893 = vmatprep.subr.bf16.mxu0 0
      %894 = vmatpush1.bf16.xpose.msra.mxu0 0
      %895 = vmatprep.subr.bf16.mxu0 0
      %896 = vmatpush1.bf16.xpose.msra.mxu0 0
      %897 = vmatprep.subr.bf16.mxu0 0
      %898 = vmatpush1.bf16.xpose.msra.mxu0 0
      %899 = vmatprep.subr.bf16.mxu0 0
      %900 = vmatpush1.bf16.xpose.msra.mxu0 0
      %901 = vmatprep.subr.bf16.mxu0 0
      %902 = vmatpush1.bf16.xpose.msra.mxu0 0
      %903 = vmatprep.subr.bf16.mxu0 0
      %904 = vmatpush1.bf16.xpose.msra.mxu0 0
      %905 = vmatprep.subr.bf16.mxu0 0
      %906 = vmatpush1.bf16.xpose.msra.mxu0 0
      %907 = vmatprep.subr.bf16.mxu0 0
      %908 = vmatpush1.bf16.xpose.msra.mxu0 0
      %909 = vmatprep.subr.bf16.mxu0 0
      %910 = vmatpush1.bf16.xpose.msra.mxu0 0
      %911 = vmatprep.subr.bf16.mxu0 0
      %912 = vmatpush1.bf16.xpose.msra.mxu0 0
      %913 = vmatprep.subr.bf16.mxu0 0
      %914 = vmatpush1.bf16.xpose.msra.mxu0 0
      %915 = vmatprep.subr.bf16.mxu0 0
      %916 = vmatpush1.bf16.xpose.msra.mxu0 0
      %917 = vmatprep.subr.bf16.mxu0 0
      %918 = vmatpush1.bf16.xpose.msra.mxu0 0
      %919 = vmatprep.mubr.bf16.mxu0 0
      %920 = vmatmul.mubr.bf16.gmra.mrb[0].mxu0 %v882
      %v921 = vpop.f32.mrb[0].mxu0
      %v922 = vadd.f32 0.0, %v921
      %v923 = vpop.f32.mrb[0].mxu0
      %v924 = vpop.f32.mrb[0].mxu0
      %v925 = vpop.f32.mrb[0].mxu0
      %926 = vdwg.mxu0
      %v927 = vsel %vm169, %v922, -inf
      %928 = vmax.xlane.f32.xlu0 %v927
      %v929 = vpop.xlane.xlu0 %928
      %v930 = vsub.f32 %v922, %v929
      %v931 = vmul.f32 %v930, 1.442695
      %v932 = vpow.pop %v931
      %v933 = vsel %vm169, %v932, 0.0
      %934 = vadd.xlane.f32.xlu0 %v933
      %v935 = vpop.xlane.xlu0 %934
      %v936 = vpack.c.bf16 %v932, %v932
      %937 = vrot.lane.b32.xlu0 %v878, 40
      %v938 = vpop.permute.xlu0 %937
      %v940 = vsel %vm169, %v936, 0
      %v943 = vsel %vm185, %v938, 0
      %945 = vmatprep.subr.bf16.mxu0 0
      %946 = vmatpush1.bf16.msra.mxu0 %v943
      %947 = vmatprep.subr.bf16.mxu0 0
      %948 = vmatpush1.bf16.msra.mxu0 0
      %949 = vmatprep.subr.bf16.mxu0 0
      %950 = vmatpush1.bf16.msra.mxu0 0
      %951 = vmatprep.subr.bf16.mxu0 0
      %952 = vmatpush1.bf16.msra.mxu0 0
      %953 = vmatprep.subr.bf16.mxu0 0
      %954 = vmatpush1.bf16.msra.mxu0 0
      %955 = vmatprep.subr.bf16.mxu0 0
      %956 = vmatpush1.bf16.msra.mxu0 0
      %957 = vmatprep.subr.bf16.mxu0 0
      %958 = vmatpush1.bf16.msra.mxu0 0
      %959 = vmatprep.subr.bf16.mxu0 0
      %960 = vmatpush1.bf16.msra.mxu0 0
      %961 = vmatprep.subr.bf16.mxu0 0
      %962 = vmatpush1.bf16.msra.mxu0 0
      %963 = vmatprep.subr.bf16.mxu0 0
      %964 = vmatpush1.bf16.msra.mxu0 0
      %965 = vmatprep.subr.bf16.mxu0 0
      %966 = vmatpush1.bf16.msra.mxu0 0
      %967 = vmatprep.subr.bf16.mxu0 0
      %968 = vmatpush1.bf16.msra.mxu0 0
      %969 = vmatprep.subr.bf16.mxu0 0
      %970 = vmatpush1.bf16.msra.mxu0 0
      %971 = vmatprep.subr.bf16.mxu0 0
      %972 = vmatpush1.bf16.msra.mxu0 0
      %973 = vmatprep.subr.bf16.mxu0 0
      %974 = vmatpush1.bf16.msra.mxu0 0
      %975 = vmatprep.subr.bf16.mxu0 0
      %976 = vmatpush1.bf16.msra.mxu0 0
      %977 = vmatprep.mubr.bf16.mxu0 0
      %978 = vmatmul.mubr.bf16.gmra.mrb[0].mxu0 %v940
      %v979 = vpop.f32.mrb[0].mxu0
      %v980 = vadd.f32 0.0, %v979
      %v981 = vpop.f32.mrb[0].mxu0
      %v982 = vpop.f32.mrb[0].mxu0
      %v983 = vpop.f32.mrb[0].mxu0
      %984 = vdwg.mxu0
      %v985 = vrcp.pop %v935
      %v986 = vmul.f32 %v980, %v985
      %v987 = vpack.c.bf16 %v986, %v986
      %v989 = vunpack.c.l.b16 %v987
      %v990 = vpack.c.b16 %v989, %v989
      %991 = vrot.lane.b32.xlu0 %v990, 24
      %v992 = vpop.permute.xlu0 %991
      %vm994 = vcmask 224448
      %995 = vst.msk [vmem:[%s111] sm:$0xf] %vm994, %v992
      %v996 = vld [vmem:[%s107] sm:$0xf]
      %v997 = vunpack.c.l.bf16 %v996
      %v998 = vmul.f32 %v997, 0.5
      %v999 = vpack.c.bf16 %v998, %v998
      %1001 = vrot.lane.b32.xlu0 %v999, 100
      %v1002 = vpop.permute.xlu0 %1001
      %v1004 = vunpack.c.l.b16 %v996
      %v1005 = vpack.c.b16 %v1004, %v1004
      %1006 = vrot.lane.b32.xlu0 %v1005, 68
      %v1007 = vpop.permute.xlu0 %1006
      %v1009 = vsel %vm122, %v1002, 0
      %v1012 = vsel %vm122, %v1007, 0
      %1014 = vmatprep.subr.bf16.mxu0 0
      %1015 = vmatpush1.bf16.xpose.msra.mxu0 %v1012
      %1016 = vmatprep.subr.bf16.mxu0 0
      %1017 = vmatpush1.bf16.xpose.msra.mxu0 0
      %1018 = vmatprep.subr.bf16.mxu0 0
      %1019 = vmatpush1.bf16.xpose.msra.mxu0 0
      %1020 = vmatprep.subr.bf16.mxu0 0
      %1021 = vmatpush1.bf16.xpose.msra.mxu0 0
      %1022 = vmatprep.subr.bf16.mxu0 0
      %1023 = vmatpush1.bf16.xpose.msra.mxu0 0
      %1024 = vmatprep.subr.bf16.mxu0 0
      %1025 = vmatpush1.bf16.xpose.msra.mxu0 0
      %1026 = vmatprep.subr.bf16.mxu0 0
      %1027 = vmatpush1.bf16.xpose.msra.mxu0 0
      %1028 = vmatprep.subr.bf16.mxu0 0
      %1029 = vmatpush1.bf16.xpose.msra.mxu0 0
      %1030 = vmatprep.subr.bf16.mxu0 0
      %1031 = vmatpush1.bf16.xpose.msra.mxu0 0
      %1032 = vmatprep.subr.bf16.mxu0 0
      %1033 = vmatpush1.bf16.xpose.msra.mxu0 0
      %1034 = vmatprep.subr.bf16.mxu0 0
      %1035 = vmatpush1.bf16.xpose.msra.mxu0 0
      %1036 = vmatprep.subr.bf16.mxu0 0
      %1037 = vmatpush1.bf16.xpose.msra.mxu0 0
      %1038 = vmatprep.subr.bf16.mxu0 0
      %1039 = vmatpush1.bf16.xpose.msra.mxu0 0
      %1040 = vmatprep.subr.bf16.mxu0 0
      %1041 = vmatpush1.bf16.xpose.msra.mxu0 0
      %1042 = vmatprep.subr.bf16.mxu0 0
      %1043 = vmatpush1.bf16.xpose.msra.mxu0 0
      %1044 = vmatprep.subr.bf16.mxu0 0
      %1045 = vmatpush1.bf16.xpose.msra.mxu0 0
      %1046 = vmatprep.mubr.bf16.mxu0 0
      %1047 = vmatmul.mubr.bf16.gmra.mrb[0].mxu0 %v1009
      %v1048 = vpop.f32.mrb[0].mxu0
      %v1049 = vadd.f32 0.0, %v1048
      %v1050 = vpop.f32.mrb[0].mxu0
      %v1051 = vpop.f32.mrb[0].mxu0
      %v1052 = vpop.f32.mrb[0].mxu0
      %1053 = vdwg.mxu0
      %v1054 = vsel %vm169, %v1049, -inf
      %1055 = vmax.xlane.f32.xlu0 %v1054
      %v1056 = vpop.xlane.xlu0 %1055
      %v1057 = vsub.f32 %v1049, %v1056
      %v1058 = vmul.f32 %v1057, 1.442695
      %v1059 = vpow.pop %v1058
      %v1060 = vsel %vm169, %v1059, 0.0
      %1061 = vadd.xlane.f32.xlu0 %v1060
      %v1062 = vpop.xlane.xlu0 %1061
      %v1063 = vpack.c.bf16 %v1059, %v1059
      %1064 = vrot.lane.b32.xlu0 %v1005, 36
      %v1065 = vpop.permute.xlu0 %1064
      %v1067 = vsel %vm169, %v1063, 0
      %v1070 = vsel %vm185, %v1065, 0
      %1072 = vmatprep.subr.bf16.mxu0 0
      %1073 = vmatpush1.bf16.msra.mxu0 %v1070
      %1074 = vmatprep.subr.bf16.mxu0 0
      %1075 = vmatpush1.bf16.msra.mxu0 0
      %1076 = vmatprep.subr.bf16.mxu0 0
      %1077 = vmatpush1.bf16.msra.mxu0 0
      %1078 = vmatprep.subr.bf16.mxu0 0
      %1079 = vmatpush1.bf16.msra.mxu0 0
      %1080 = vmatprep.subr.bf16.mxu0 0
      %1081 = vmatpush1.bf16.msra.mxu0 0
      %1082 = vmatprep.subr.bf16.mxu0 0
      %1083 = vmatpush1.bf16.msra.mxu0 0
      %1084 = vmatprep.subr.bf16.mxu0 0
      %1085 = vmatpush1.bf16.msra.mxu0 0
      %1086 = vmatprep.subr.bf16.mxu0 0
      %1087 = vmatpush1.bf16.msra.mxu0 0
      %1088 = vmatprep.subr.bf16.mxu0 0
      %1089 = vmatpush1.bf16.msra.mxu0 0
      %1090 = vmatprep.subr.bf16.mxu0 0
      %1091 = vmatpush1.bf16.msra.mxu0 0
      %1092 = vmatprep.subr.bf16.mxu0 0
      %1093 = vmatpush1.bf16.msra.mxu0 0
      %1094 = vmatprep.subr.bf16.mxu0 0
      %1095 = vmatpush1.bf16.msra.mxu0 0
      %1096 = vmatprep.subr.bf16.mxu0 0
      %1097 = vmatpush1.bf16.msra.mxu0 0
      %1098 = vmatprep.subr.bf16.mxu0 0
      %1099 = vmatpush1.bf16.msra.mxu0 0
      %1100 = vmatprep.subr.bf16.mxu0 0
      %1101 = vmatpush1.bf16.msra.mxu0 0
      %1102 = vmatprep.subr.bf16.mxu0 0
      %1103 = vmatpush1.bf16.msra.mxu0 0
      %1104 = vmatprep.mubr.bf16.mxu0 0
      %1105 = vmatmul.mubr.bf16.gmra.mrb[0].mxu0 %v1067
      %v1106 = vpop.f32.mrb[0].mxu0
      %v1107 = vadd.f32 0.0, %v1106
      %v1108 = vpop.f32.mrb[0].mxu0
      %v1109 = vpop.f32.mrb[0].mxu0
      %v1110 = vpop.f32.mrb[0].mxu0
      %1111 = vdwg.mxu0
      %v1112 = vrcp.pop %v1062
      %v1113 = vmul.f32 %v1107, %v1112
      %v1114 = vpack.c.bf16 %v1113, %v1113
      %v1116 = vunpack.c.l.b16 %v1114
      %v1117 = vpack.c.b16 %v1116, %v1116
      %1118 = vrot.lane.b32.xlu0 %v1117, 28
      %v1119 = vpop.permute.xlu0 %1118
      %vm1121 = vcmask 257248
      %1122 = vst.msk [vmem:[%s111] sm:$0xf] %vm1121, %v1119
      %p1123 = scmp.lt.s32.totalorder %s12, 1
      %s1124 = scalar_select %p1123, %s12, 1
      %s1125 = smul.addr %s1124, 4
      %s1126 = scalar_lea.vmem %s1, %s1125
      // Predicated region
      $region25: #{attention_forward.4} parent=23 // pred_check
        %p1127 = pneg %p56
      $region26: #{attention_forward.4} parent=23 // pred_check_branch
        %1129 = sbr.rel (%p1127) target = $region28
      $region27: #{attention_forward.4} parent=23 // pred_region
        _
      $region28: #{attention_forward.4} parent=23 // pred_fallthru
        _
    $region24: #{attention_forward.4} parent=5 // pred_fallthru
      _
    %p1130 = scmp.le.s32.totalorder 2, %s7
    // Predicated region
    $region29: #{attention_forward.4} parent=5 // pred_check
      %p1131 = pneg %p1130
    $region30: #{attention_forward.4} parent=5 // pred_check_branch
      %1133 = sbr.rel (%p1131) target = $region32
    $region31: #{attention_forward.4} parent=5 // pred_region
      %s1134 = ssub.s32 %s7, 2
      // Predicated region
      $region33: #{attention_forward.4} parent=31 // pred_check
        %p1135 = pneg %p62
      $region34: #{attention_forward.4} parent=31 // pred_check_branch
        %1137 = sbr.rel (%p1135) target = $region36
      $region35: #{attention_forward.4} parent=31 // pred_region
        %p1138 = scmp.lt.s32.totalorder %s13, 1
        %s1139 = scalar_select %p1138, %s13, 1
        %s1140 = smul.addr %s1139, 4
        %s1141 = scalar_lea.vmem %s1, %s1140
      $region36: #{attention_forward.4} parent=31 // pred_fallthru
        _
    $region32: #{attention_forward.4} parent=5 // pred_fallthru
      _
  $region6: #{attention_forward.4} parent=0 // loop_footer
    %s11 = sadd.s32 1, %s7
  $region7: #{attention_forward.4} parent=0 // loop_footer_branch
    %6 = sbr.rel target = $region3
  $region8: #{attention_forward.4} parent=0 // loop_exit
    _

</llo_original>
